<compile_context>
chip_gen: v7x
topology: tpu7x:2x2x1
jax: 0.10.0
libtpu: 0.0.40
codegen_flags: <defaults>
</compile_context>

<pallas_src>
import functools

import jax
import jax.numpy as jnp
from jax import lax
from jax.experimental import pallas as pl
from jax.experimental.pallas import tpu as pltpu

_LANE = 128
_SUBLANE = 8
_NEG_BIG = -1e30


def _pad_to(n, m):
    return ((n + m - 1) // m) * m


# ----------------------------------------------------------------------------
# Hardware-aware helpers
# ----------------------------------------------------------------------------
@functools.lru_cache(maxsize=None)
def _vmem_capacity_bytes():
    """Physical VMEM per core (64 MiB on v7x, 128 MiB on v5e/v6e)."""
    try:
        return int(pltpu.get_tpu_info().vmem_capacity_bytes)
    except Exception:
        return 64 * 1024 * 1024          # conservative fallback (v7x per-core)


def _vmem_budget_bytes():
    # Leave ~20% headroom for compiler-internal scratch and pipeline buffers.
    return int(0.8 * _vmem_capacity_bytes())


def _probe_copy_kernel(x_ref, o_ref):
    o_ref[...] = x_ref[...] * 2.0


@functools.lru_cache(maxsize=None)
def _single_buffer_ok():
    """Does this jax build honor pipeline_mode=pl.Buffered(1) on TPU?"""
    if not hasattr(pl, "Buffered"):
        return False
    try:
        fn = pl.pallas_call(
            _probe_copy_kernel,
            out_shape=jax.ShapeDtypeStruct((8, 128), jnp.float32),
            grid=(1,),
            in_specs=[pl.BlockSpec((8, 128), lambda i: (0, 0),
                                   pipeline_mode=pl.Buffered(1))],
            out_specs=pl.BlockSpec((8, 128), lambda i: (0, 0)),
        )
        jax.block_until_ready(fn(jnp.zeros((8, 128), jnp.float32)))
        return True
    except Exception:
        return False


def _const_spec(block_shape, index_map):
    """BlockSpec for an operand whose block never changes across the grid:
    single-buffered when supported (halves its VMEM footprint)."""
    if _single_buffer_ok():
        return pl.BlockSpec(block_shape, index_map, pipeline_mode=pl.Buffered(1))
    return pl.BlockSpec(block_shape, index_map)


def _pick_tm(b_pad):
    """Batch tile: full MXU-sized tiles, >= 2 m-tiles when the batch allows
    (v7x has 2 TensorCores sharing the 'parallel' axis)."""
    if b_pad % 256 == 0 and b_pad >= 512:
        return 256
    if b_pad % 128 == 0 and b_pad > 128:
        return 128
    return b_pad                          # small batch: a single tile


def _pick_tk(in_pad):
    # Prefer K tiles that are multiples of 256 (v6e/v7x MXU is 256x256);
    # 128 only as the last resort (native size on v5e anyway).
    for c in (1024, 512, 256, 128):
        if in_pad % c == 0:
            return c
    return in_pad


def _pick_n_chunks(tm):
    """Independent row sub-chains to interleave inside the 20x matmul loop."""
    if tm >= 32 and tm % 32 == 0:
        return 4
    if tm >= 16 and tm % 16 == 0:
        return 2
    return 1


def _batch_pad(b):
    """Pad the batch to a full m-tile (not just 8) so tm never degrades."""
    if b > 128:
        return _pad_to(b, 128)
    return _pad_to(b, _SUBLANE)


# ----------------------------------------------------------------------------
# Fused (Linear -> ExpandContract) kernels
# ----------------------------------------------------------------------------
def _expand_contract_epilogue(y, b1, w2, b2, *, out_dim, eps, n_iter, n_chunks):
    """SiLU -> masked softmax -> n_iter x (same Linear) -> RMSNorm.

    y : (tm, n_pad) f32 pre-activation of the first Linear (bias not yet added).
    b1, b2 : (1, n_pad) f32.  w2 : (n_pad, n_pad) bf16, pre-transposed.
    Returns (tm, n_pad) f32 with padded lanes exactly zero.
    """
    y = y + b1                                           # (tm, n_pad) f32
    tm, n_pad = y.shape

    # Lane mask: real features live in [0, out_dim).
    valid = lax.broadcasted_iota(jnp.int32, (tm, n_pad), 1) < out_dim

    # SiLU. Clamp the exp argument so exp(-y) cannot overflow to inf; the
    # full-tile reciprocal runs on the EUP slot (approx).
    e = jnp.exp(-jnp.maximum(y, -80.0))
    y = y * pl.reciprocal(1.0 + e, approx=True)

    # Numerically stable softmax over the real lanes only (exact 1/denom on
    # the (tm, 1) reduction output — nearly free, matches torch closely).
    y = jnp.where(valid, y, _NEG_BIG)
    y = y - jnp.max(y, axis=-1, keepdims=True)
    e = jnp.where(valid, jnp.exp(y), 0.0)
    y = e * (1.0 / jnp.sum(e, axis=-1, keepdims=True))

    # The SAME Linear applied n_iter (=20) times. Each chain is serial, so the
    # rows are split into independent sub-chains and the (unrolled) loop issues
    # one matmul per chain per iteration: chain A's drain overlaps chain B's
    # push, and the b2 broadcast-add hides under MXU latency.
    rows = tm // n_chunks
    parts = tuple(y[c * rows:(c + 1) * rows, :] for c in range(n_chunks))

    def body(_, ps):
        return tuple(
            jnp.dot(p.astype(w2.dtype), w2,
                    preferred_element_type=jnp.float32) + b2
            for p in ps)

    parts = lax.fori_loop(0, n_iter, body, parts, unroll=True)
    y = parts[0] if n_chunks == 1 else jnp.concatenate(parts, axis=0)

    # RMSNorm over the real lanes (padded lanes are exactly zero so the sum
    # only sees real features; divide by the true width). eps stays OUTSIDE
    # the sqrt, matching the reference module's RMSNorm.
    norm = jnp.sqrt(jnp.sum(y * y, axis=-1, keepdims=True) * (1.0 / out_dim))
    return y * (1.0 / (norm + eps))


def _fused_kernel_single_k(x_ref, w1_ref, b1_ref, w2_ref, b2_ref, o_ref, *,
                           out_dim, eps, n_iter, n_chunks):
    """Whole W1^T resident: no k axis, no accumulator scratch."""
    y = jnp.dot(x_ref[...], w1_ref[...], preferred_element_type=jnp.float32)
    out = _expand_contract_epilogue(
        y, b1_ref[...], w2_ref[...], b2_ref[...],
        out_dim=out_dim, eps=eps, n_iter=n_iter, n_chunks=n_chunks)
    o_ref[...] = out.astype(o_ref.dtype)


def _fused_kernel_multi_k(x_ref, w1_ref, b1_ref, w2_ref, b2_ref, o_ref,
                          acc_ref, *, out_dim, eps, n_iter, n_chunks):
    """W1^T streamed in K panels; f32 accumulator scratch across the k axis."""
    k = pl.program_id(1)

    @pl.when(k == 0)
    def _():
        acc_ref[...] = jnp.zeros_like(acc_ref)

    acc_ref[...] += jnp.dot(x_ref[...], w1_ref[...],
                            preferred_element_type=jnp.float32)

    @pl.when(k == pl.num_programs(1) - 1)
    def _():
        out = _expand_contract_epilogue(
            acc_ref[...], b1_ref[...], w2_ref[...], b2_ref[...],
            out_dim=out_dim, eps=eps, n_iter=n_iter, n_chunks=n_chunks)
        o_ref[...] = out.astype(o_ref.dtype)


def fused_linear_expand_contract(x_pad, w1t, b1, w2t, b2, *, out_dim,
                                 eps=1e-8, n_iter=20):
    """x_pad: (B_pad, In_pad) bf16, padded lanes/rows zero.
    w1t: (In_pad, N_pad) bf16, pre-transposed, zero-padded. b1: (1, N_pad) f32.
    w2t: (N_pad, N_pad) bf16, pre-transposed, zero-padded.  b2: (1, N_pad) f32.
    Returns (B_pad, N_pad) bf16 with padded lanes exactly zero."""
    b_pad, in_pad = x_pad.shape
    n_pad = w1t.shape[1]
    assert w1t.shape[0] == in_pad and w2t.shape == (n_pad, n_pad)
    assert x_pad.dtype == w1t.dtype == w2t.dtype

    budget = _vmem_budget_bytes()
    w_bytes = jnp.dtype(w1t.dtype).itemsize
    act_bytes = jnp.dtype(x_pad.dtype).itemsize

    w2_res = n_pad * n_pad * w_bytes
    if w2_res > int(0.6 * budget):
        # TODO(synk): stream W2^T in (K, N) panels inside the 20x loop for very
        # large hidden dims (needed once n_pad^2 no longer fits v7x's 64 MiB).
        raise NotImplementedError(
            f"resident W2^T needs {w2_res} B but the VMEM budget is {budget} B")

    tm = _pick_tm(b_pad)
    assert b_pad % tm == 0
    n_chunks = _pick_n_chunks(tm)

    # Can the whole of W1^T also sit resident (k axis disappears)?
    single_k_bytes = (w2_res
                      + in_pad * n_pad * w_bytes          # W1^T resident
                      + 2 * tm * in_pad * act_bytes       # x tile (double buf)
                      + 2 * tm * n_pad * act_bytes        # out tile (double buf)
                      + 4 * n_pad * 4)                    # biases
    single_k = single_k_bytes <= int(0.7 * budget)

    if single_k:
        grid = (b_pad // tm,)
        in_specs = [
            pl.BlockSpec((tm, in_pad), lambda m: (m, 0)),       # x tile
            _const_spec((in_pad, n_pad), lambda m: (0, 0)),     # W1^T (resident)
            _const_spec((1, n_pad), lambda m: (0, 0)),          # b1
            _const_spec((n_pad, n_pad), lambda m: (0, 0)),      # W2^T (resident)
            _const_spec((1, n_pad), lambda m: (0, 0)),          # b2
        ]
        out_specs = pl.BlockSpec((tm, n_pad), lambda m: (m, 0))
        scratch_shapes = []
        dim_sem = ("parallel",)
        kernel = functools.partial(_fused_kernel_single_k, out_dim=out_dim,
                                   eps=eps, n_iter=n_iter, n_chunks=n_chunks)
        est = single_k_bytes
    else:
        tk = _pick_tk(in_pad)
        grid = (b_pad // tm, in_pad // tk)
        in_specs = [
            pl.BlockSpec((tm, tk), lambda m, k: (m, k)),        # x tile
            pl.BlockSpec((tk, n_pad), lambda m, k: (k, 0)),     # W1^T panel
            _const_spec((1, n_pad), lambda m, k: (0, 0)),       # b1
            _const_spec((n_pad, n_pad), lambda m, k: (0, 0)),   # W2^T (resident)
            _const_spec((1, n_pad), lambda m, k: (0, 0)),       # b2
        ]
        out_specs = pl.BlockSpec((tm, n_pad), lambda m, k: (m, 0))
        scratch_shapes = [pltpu.VMEM((tm, n_pad), jnp.float32)]
        dim_sem = ("parallel", "arbitrary")
        kernel = functools.partial(_fused_kernel_multi_k, out_dim=out_dim,
                                   eps=eps, n_iter=n_iter, n_chunks=n_chunks)
        est = (2 * tm * tk * act_bytes         # x tile (double buffered)
               + 2 * tk * n_pad * w_bytes      # W1^T panel (double buffered)
               + w2_res                        # W2^T (single buffered)
               + 4 * n_pad * 4                 # biases
               + 2 * tm * n_pad * act_bytes    # out tile (double buffered)
               + tm * n_pad * 4)               # f32 accumulator scratch

    vmem_limit = int(min(max(2 * est, 16 * 1024 * 1024), budget))

    return pl.pallas_call(
        kernel,
        out_shape=jax.ShapeDtypeStruct((b_pad, n_pad), x_pad.dtype),
        grid_spec=pltpu.PrefetchScalarGridSpec(
            num_scalar_prefetch=0,
            grid=grid,
            in_specs=in_specs,
            out_specs=out_specs,
            scratch_shapes=scratch_shapes,
        ),
        compiler_params=pltpu.CompilerParams(
            dimension_semantics=dim_sem,
            vmem_limit_bytes=vmem_limit,
        ),
    )(x_pad, w1t, b1, w2t, b2)


# ----------------------------------------------------------------------------
# SimpleMLP: deterministic parameter construction (PyTorch-style init),
# host-side padding / pre-transposition, forward pass.
# ----------------------------------------------------------------------------
def _init_linear(key, in_dim, out_dim):
    kw, kb = jax.random.split(key)
    bound = 1.0 / (in_dim ** 0.5)
    w = jax.random.uniform(kw, (out_dim, in_dim), jnp.float32, -bound, bound)
    b = jax.random.uniform(kb, (out_dim,), jnp.float32, -bound, bound)
    return w, b


def _pack_layer(w1, b1, w2, b2, matmul_dtype):
    out_dim, in_dim = w1.shape
    h = w2.shape[0]
    assert h == out_dim
    in_pad = _pad_to(in_dim, _LANE)
    n_pad = _pad_to(out_dim, _LANE)
    # Pre-transpose to (in, out) and zero-pad (padded rows/cols contribute 0).
    w1t = jnp.zeros((in_pad, n_pad), jnp.float32).at[:in_dim, :out_dim].set(w1.T)
    w2t = jnp.zeros((n_pad, n_pad), jnp.float32).at[:h, :h].set(w2.T)
    b1p = jnp.zeros((1, n_pad), jnp.float32).at[0, :out_dim].set(b1)
    b2p = jnp.zeros((1, n_pad), jnp.float32).at[0, :h].set(b2)
    return dict(w1t=w1t.astype(matmul_dtype), b1=b1p,
                w2t=w2t.astype(matmul_dtype), b2=b2p,
                in_dim=in_dim, out_dim=out_dim)


def build_simple_mlp_params(key, input_dim, hidden_dim, output_dim,
                            num_layers=32, matmul_dtype=jnp.bfloat16):
    factor = 4
    # (linear_in, linear_out, ecl_width) for every (Linear, ECL) pair.
    pair_dims = [(input_dim, hidden_dim, hidden_dim),
                 (hidden_dim, hidden_dim, hidden_dim)]
    for _ in range(num_layers - 2):
        pair_dims.append((hidden_dim, factor * hidden_dim, factor * hidden_dim))
        pair_dims.append((factor * hidden_dim, hidden_dim, hidden_dim))
    pair_dims.append((hidden_dim, hidden_dim, hidden_dim))
    # Final pair: Linear(hidden, output) + ExpandContractLayer(hidden); as in
    # the PyTorch module this requires output_dim == hidden_dim.
    assert output_dim == hidden_dim, "SimpleMLP requires output_dim == hidden_dim"
    pair_dims.append((hidden_dim, output_dim, hidden_dim))

    layers = []
    for (i, o, h) in pair_dims:
        key, k1, k2 = jax.random.split(key, 3)
        w1, b1 = _init_linear(k1, i, o)
        w2, b2 = _init_linear(k2, h, h)
        layers.append(_pack_layer(w1, b1, w2, b2, matmul_dtype))
    return layers


def simple_mlp_forward(layers, x):
    b, in_dim = x.shape
    assert in_dim == layers[0]["in_dim"]
    b_pad = _batch_pad(b)
    in_pad = layers[0]["w1t"].shape[0]
    act_dtype = layers[0]["w1t"].dtype
    # Pad once (bf16 activations); every fused layer consumes/produces padded,
    # zero-lane slabs, so no re-padding between layers.
    xp = jnp.zeros((b_pad, in_pad), act_dtype).at[:b, :in_dim].set(
        x.astype(act_dtype))
    for layer in layers:
        xp = fused_linear_expand_contract(
            xp, layer["w1t"], layer["b1"], layer["w2t"], layer["b2"],
            out_dim=layer["out_dim"])
    return xp[:b, :layers[-1]["out_dim"]].astype(jnp.float32)


# ----------------------------------------------------------------------------
if __name__ == "__main__":
    batch = 8
    input_dim = 16
    hidden_dim = 32
    output_dim = 32          # must equal hidden_dim (see note above)
    num_layers = 3           # small; structure identical to num_layers=32 case

    key = jax.random.PRNGKey(0)
    k_params, k_x = jax.random.split(key)

    layers = build_simple_mlp_params(
        k_params, input_dim, hidden_dim, output_dim, num_layers=num_layers)
    x = jax.random.normal(k_x, (batch, input_dim), dtype=jnp.float32)

    out = jax.block_until_ready(simple_mlp_forward(layers, x))

    assert out.shape == (batch, output_dim), out.shape
    assert bool(jnp.all(jnp.isfinite(out)))
    print("KERNEL_OK")
</pallas_src>

<mosaic_0001>
module attributes {stable_mosaic.version = 11 : i64} {
  func.func @_probe_copy_kernel(%arg0: i32, %arg1: memref<8x128xf32, #tpu.memory_space<vmem>>, %arg2: memref<8x128xf32, #tpu.memory_space<vmem>>) attributes {dimension_semantics = [#tpu.dimension_semantics<arbitrary>], iteration_bounds = array<i64: 1>, scalar_prefetch = 0 : i64, scratch_operands = 0 : i64, tpu.core_type = #tpu.core_type<tc>, window_params = [{pipeline_mode = #tpu.pipeline_mode<synchronous>, transform_indices = @transform_0, window_bounds = array<i64: 8, 128>}, {pipeline_mode = #tpu.pipeline_mode<synchronous>, transform_indices = @transform_1, window_bounds = array<i64: 8, 128>}]} {
    %c0 = arith.constant 0 : index
    %c0_0 = arith.constant 0 : index
    %0 = vector.load %arg1[%c0, %c0_0] : memref<8x128xf32, #tpu.memory_space<vmem>>, vector<8x128xf32>
    %cst = arith.constant 2.000000e+00 : f32
    %1 = vector.broadcast %cst : f32 to vector<8x128xf32>
    %2 = arith.mulf %0, %1 : vector<8x128xf32>
    %c0_1 = arith.constant 0 : index
    %c0_2 = arith.constant 0 : index
    %3 = vector.load %arg2[%c0_1, %c0_2] : memref<8x128xf32, #tpu.memory_space<vmem>>, vector<8x128xf32>
    tpu.vector_store %arg2[%c0_1, %c0_2], %2 {strides = array<i32>} : memref<8x128xf32, #tpu.memory_space<vmem>>, vector<8x128xf32>,
    return
  }
  func.func @transform_0(%arg0: i32) -> (i32, i32) {
    %c0_i32 = arith.constant 0 : i32
    %c0_i32_0 = arith.constant 0 : i32
    %c0_i32_1 = arith.constant 0 : i32
    return %c0_i32, %c0_i32_0 : i32, i32
  }
  func.func @transform_1(%arg0: i32) -> (i32, i32) {
    %c0_i32 = arith.constant 0 : i32
    %c0_i32_0 = arith.constant 0 : i32
    %c0_i32_1 = arith.constant 0 : i32
    return %c0_i32, %c0_i32_0 : i32, i32
  }
}

module attributes {stable_mosaic.version = 11 : i64} {
  func.func @_fused_kernel_single_k(%arg0: i32, %arg1: memref<8x128xbf16, #tpu.memory_space<vmem>>, %arg2: memref<128x128xbf16, #tpu.memory_space<vmem>>, %arg3: memref<1x128xf32, #tpu.memory_space<vmem>>, %arg4: memref<128x128xbf16, #tpu.memory_space<vmem>>, %arg5: memref<1x128xf32, #tpu.memory_space<vmem>>, %arg6: memref<8x128xbf16, #tpu.memory_space<vmem>>) attributes {dimension_semantics = [#tpu.dimension_semantics<parallel>], iteration_bounds = array<i64: 1>, scalar_prefetch = 0 : i64, scratch_operands = 0 : i64, tpu.core_type = #tpu.core_type<tc>, window_params = [{transform_indices = @transform_0, window_bounds = array<i64: 8, 128>}, {pipeline_mode = #tpu.pipeline_mode<synchronous>, transform_indices = @transform_1, window_bounds = array<i64: 128, 128>}, {pipeline_mode = #tpu.pipeline_mode<synchronous>, transform_indices = @transform_2, window_bounds = array<i64: 1, 128>}, {pipeline_mode = #tpu.pipeline_mode<synchronous>, transform_indices = @transform_3, window_bounds = array<i64: 128, 128>}, {pipeline_mode = #tpu.pipeline_mode<synchronous>, transform_indices = @transform_4, window_bounds = array<i64: 1, 128>}, {transform_indices = @transform_5, window_bounds = array<i64: 8, 128>}]} {
    %c0 = arith.constant 0 : index
    %c0_0 = arith.constant 0 : index
    %0 = vector.load %arg1[%c0, %c0_0] : memref<8x128xbf16, #tpu.memory_space<vmem>>, vector<8x128xbf16>
    %c0_1 = arith.constant 0 : index
    %c0_2 = arith.constant 0 : index
    %1 = vector.load %arg2[%c0_1, %c0_2] : memref<128x128xbf16, #tpu.memory_space<vmem>>, vector<128x128xbf16>
    %cst = arith.constant dense<0.000000e+00> : vector<8x128xf32>
    %2 = tpu.matmul %0, %1, %cst {dimension_numbers = #tpu.dot_dimension_numbers<[1], [0], [0], [1], [0, 0, 1, 1], [], []>} : vector<8x128xbf16>, vector<128x128xbf16>, vector<8x128xf32> -> vector<8x128xf32>
    %c0_3 = arith.constant 0 : index
    %c0_4 = arith.constant 0 : index
    %3 = vector.load %arg3[%c0_3, %c0_4] : memref<1x128xf32, #tpu.memory_space<vmem>>, vector<1x128xf32>
    %c0_5 = arith.constant 0 : index
    %c0_6 = arith.constant 0 : index
    %4 = vector.load %arg4[%c0_5, %c0_6] : memref<128x128xbf16, #tpu.memory_space<vmem>>, vector<128x128xbf16>
    %c0_7 = arith.constant 0 : index
    %c0_8 = arith.constant 0 : index
    %5 = vector.load %arg5[%c0_7, %c0_8] : memref<1x128xf32, #tpu.memory_space<vmem>>, vector<1x128xf32>
    %6 = vector.broadcast %3 : vector<1x128xf32> to vector<8x128xf32>
    %7 = arith.addf %2, %6 : vector<8x128xf32>
    %8 = tpu.iota {dimensions = array<i32: 1>} : vector<8x128xi32>
    %c32_i32 = arith.constant 32 : i32
    %9 = vector.broadcast %c32_i32 : i32 to vector<8x128xi32>
    %10 = arith.cmpi slt, %8, %9 : vector<8x128xi32>
    %cst_9 = arith.constant -8.000000e+01 : f32
    %11 = vector.broadcast %cst_9 : f32 to vector<8x128xf32>
    %12 = arith.maximumf %7, %11 : vector<8x128xf32>
    %cst_10 = arith.constant 0.000000e+00 : f32
    %13 = vector.broadcast %cst_10 : f32 to vector<8x128xf32>
    %14 = arith.subf %13, %12 : vector<8x128xf32>
    %15 = math.exp %14 : vector<8x128xf32>
    %cst_11 = arith.constant 1.000000e+00 : f32
    %16 = vector.broadcast %cst_11 : f32 to vector<8x128xf32>
    %17 = arith.addf %16, %15 : vector<8x128xf32>
    %18 = tpu.reciprocal %17 {approx = true} : vector<8x128xf32> -> vector<8x128xf32>
    %19 = arith.mulf %7, %18 : vector<8x128xf32>
    %cst_12 = arith.constant -1.000000e+30 : f32
    %20 = vector.broadcast %cst_12 : f32 to vector<8x128xf32>
    %21 = arith.select %10, %19, %20 : vector<8x128xi1>, vector<8x128xf32>
    %cst_13 = arith.constant dense<0xFF800000> : vector<8xf32>
    %22 = vector.multi_reduction <maximumf>, %21, %cst_13 [1] : vector<8x128xf32> to vector<8xf32>
    %23 = vector.shape_cast %22 : vector<8xf32> to vector<8x1xf32>
    %24 = vector.broadcast %23 : vector<8x1xf32> to vector<8x128xf32>
    %25 = arith.subf %21, %24 : vector<8x128xf32>
    %26 = math.exp %25 : vector<8x128xf32>
    %cst_14 = arith.constant 0.000000e+00 : f32
    %27 = vector.broadcast %cst_14 : f32 to vector<8x128xf32>
    %28 = arith.select %10, %26, %27 : vector<8x128xi1>, vector<8x128xf32>
    %cst_15 = arith.constant dense<0.000000e+00> : vector<8xf32>
    %29 = vector.multi_reduction <add>, %28, %cst_15 [1] : vector<8x128xf32> to vector<8xf32>
    %30 = vector.shape_cast %29 : vector<8xf32> to vector<8x1xf32>
    %cst_16 = arith.constant 1.000000e+00 : f32
    %31 = vector.broadcast %cst_16 : f32 to vector<8x1xf32>
    %32 = arith.divf %31, %30 : vector<8x1xf32>
    %33 = vector.broadcast %32 : vector<8x1xf32> to vector<8x128xf32>
    %34 = arith.mulf %28, %33 : vector<8x128xf32>
    %c0_i32 = arith.constant 0 : i32
    %35 = arith.truncf %34 : vector<8x128xf32> to vector<8x128xbf16>
    %cst_17 = arith.constant dense<0.000000e+00> : vector<8x128xf32>
    %36 = tpu.matmul %35, %4, %cst_17 {dimension_numbers = #tpu.dot_dimension_numbers<[1], [0], [0], [1], [0, 0, 1, 1], [], []>} : vector<8x128xbf16>, vector<128x128xbf16>, vector<8x128xf32> -> vector<8x128xf32>
    %37 = vector.broadcast %5 : vector<1x128xf32> to vector<8x128xf32>
    %38 = arith.addf %36, %37 : vector<8x128xf32>
    %c1_i32 = arith.constant 1 : i32
    %39 = arith.truncf %38 : vector<8x128xf32> to vector<8x128xbf16>
    %cst_18 = arith.constant dense<0.000000e+00> : vector<8x128xf32>
    %40 = tpu.matmul %39, %4, %cst_18 {dimension_numbers = #tpu.dot_dimension_numbers<[1], [0], [0], [1], [0, 0, 1, 1], [], []>} : vector<8x128xbf16>, vector<128x128xbf16>, vector<8x128xf32> -> vector<8x128xf32>
    %41 = vector.broadcast %5 : vector<1x128xf32> to vector<8x128xf32>
    %42 = arith.addf %40, %41 : vector<8x128xf32>
    %c2_i32 = arith.constant 2 : i32
    %43 = arith.truncf %42 : vector<8x128xf32> to vector<8x128xbf16>
    %cst_19 = arith.constant dense<0.000000e+00> : vector<8x128xf32>
    %44 = tpu.matmul %43, %4, %cst_19 {dimension_numbers = #tpu.dot_dimension_numbers<[1], [0], [0], [1], [0, 0, 1, 1], [], []>} : vector<8x128xbf16>, vector<128x128xbf16>, vector<8x128xf32> -> vector<8x128xf32>
    %45 = vector.broadcast %5 : vector<1x128xf32> to vector<8x128xf32>
    %46 = arith.addf %44, %45 : vector<8x128xf32>
    %c3_i32 = arith.constant 3 : i32
    %47 = arith.truncf %46 : vector<8x128xf32> to vector<8x128xbf16>
    %cst_20 = arith.constant dense<0.000000e+00> : vector<8x128xf32>
    %48 = tpu.matmul %47, %4, %cst_20 {dimension_numbers = #tpu.dot_dimension_numbers<[1], [0], [0], [1], [0, 0, 1, 1], [], []>} : vector<8x128xbf16>, vector<128x128xbf16>, vector<8x128xf32> -> vector<8x128xf32>
    %49 = vector.broadcast %5 : vector<1x128xf32> to vector<8x128xf32>
    %50 = arith.addf %48, %49 : vector<8x128xf32>
    %c4_i32 = arith.constant 4 : i32
    %51 = arith.truncf %50 : vector<8x128xf32> to vector<8x128xbf16>
    %cst_21 = arith.constant dense<0.000000e+00> : vector<8x128xf32>
    %52 = tpu.matmul %51, %4, %cst_21 {dimension_numbers = #tpu.dot_dimension_numbers<[1], [0], [0], [1], [0, 0, 1, 1], [], []>} : vector<8x128xbf16>, vector<128x128xbf16>, vector<8x128xf32> -> vector<8x128xf32>
    %53 = vector.broadcast %5 : vector<1x128xf32> to vector<8x128xf32>
    %54 = arith.addf %52, %53 : vector<8x128xf32>
    %c5_i32 = arith.constant 5 : i32
    %55 = arith.truncf %54 : vector<8x128xf32> to vector<8x128xbf16>
    %cst_22 = arith.constant dense<0.000000e+00> : vector<8x128xf32>
    %56 = tpu.matmul %55, %4, %cst_22 {dimension_numbers = #tpu.dot_dimension_numbers<[1], [0], [0], [1], [0, 0, 1, 1], [], []>} : vector<8x128xbf16>, vector<128x128xbf16>, vector<8x128xf32> -> vector<8x128xf32>
    %57 = vector.broadcast %5 : vector<1x128xf32> to vector<8x128xf32>
    %58 = arith.addf %56, %57 : vector<8x128xf32>
    %c6_i32 = arith.constant 6 : i32
    %59 = arith.truncf %58 : vector<8x128xf32> to vector<8x128xbf16>
    %cst_23 = arith.constant dense<0.000000e+00> : vector<8x128xf32>
    %60 = tpu.matmul %59, %4, %cst_23 {dimension_numbers = #tpu.dot_dimension_numbers<[1], [0], [0], [1], [0, 0, 1, 1], [], []>} : vector<8x128xbf16>, vector<128x128xbf16>, vector<8x128xf32> -> vector<8x128xf32>
    %61 = vector.broadcast %5 : vector<1x128xf32> to vector<8x128xf32>
    %62 = arith.addf %60, %61 : vector<8x128xf32>
    %c7_i32 = arith.constant 7 : i32
    %63 = arith.truncf %62 : vector<8x128xf32> to vector<8x128xbf16>
    %cst_24 = arith.constant dense<0.000000e+00> : vector<8x128xf32>
    %64 = tpu.matmul %63, %4, %cst_24 {dimension_numbers = #tpu.dot_dimension_numbers<[1], [0], [0], [1], [0, 0, 1, 1], [], []>} : vector<8x128xbf16>, vector<128x128xbf16>, vector<8x128xf32> -> vector<8x128xf32>
    %65 = vector.broadcast %5 : vector<1x128xf32> to vector<8x128xf32>
    %66 = arith.addf %64, %65 : vector<8x128xf32>
    %c8_i32 = arith.constant 8 : i32
    %67 = arith.truncf %66 : vector<8x128xf32> to vector<8x128xbf16>
    %cst_25 = arith.constant dense<0.000000e+00> : vector<8x128xf32>
    %68 = tpu.matmul %67, %4, %cst_25 {dimension_numbers = #tpu.dot_dimension_numbers<[1], [0], [0], [1], [0, 0, 1, 1], [], []>} : vector<8x128xbf16>, vector<128x128xbf16>, vector<8x128xf32> -> vector<8x128xf32>
    %69 = vector.broadcast %5 : vector<1x128xf32> to vector<8x128xf32>
    %70 = arith.addf %68, %69 : vector<8x128xf32>
    %c9_i32 = arith.constant 9 : i32
    %71 = arith.truncf %70 : vector<8x128xf32> to vector<8x128xbf16>
    %cst_26 = arith.constant dense<0.000000e+00> : vector<8x128xf32>
    %72 = tpu.matmul %71, %4, %cst_26 {dimension_numbers = #tpu.dot_dimension_numbers<[1], [0], [0], [1], [0, 0, 1, 1], [], []>} : vector<8x128xbf16>, vector<128x128xbf16>, vector<8x128xf32> -> vector<8x128xf32>
    %73 = vector.broadcast %5 : vector<1x128xf32> to vector<8x128xf32>
    %74 = arith.addf %72, %73 : vector<8x128xf32>
    %c10_i32 = arith.constant 10 : i32
    %75 = arith.truncf %74 : vector<8x128xf32> to vector<8x128xbf16>
    %cst_27 = arith.constant dense<0.000000e+00> : vector<8x128xf32>
    %76 = tpu.matmul %75, %4, %cst_27 {dimension_numbers = #tpu.dot_dimension_numbers<[1], [0], [0], [1], [0, 0, 1, 1], [], []>} : vector<8x128xbf16>, vector<128x128xbf16>, vector<8x128xf32> -> vector<8x128xf32>
    %77 = vector.broadcast %5 : vector<1x128xf32> to vector<8x128xf32>
    %78 = arith.addf %76, %77 : vector<8x128xf32>
    %c11_i32 = arith.constant 11 : i32
    %79 = arith.truncf %78 : vector<8x128xf32> to vector<8x128xbf16>
    %cst_28 = arith.constant dense<0.000000e+00> : vector<8x128xf32>
    %80 = tpu.matmul %79, %4, %cst_28 {dimension_numbers = #tpu.dot_dimension_numbers<[1], [0], [0], [1], [0, 0, 1, 1], [], []>} : vector<8x128xbf16>, vector<128x128xbf16>, vector<8x128xf32> -> vector<8x128xf32>
    %81 = vector.broadcast %5 : vector<1x128xf32> to vector<8x128xf32>
    %82 = arith.addf %80, %81 : vector<8x128xf32>
    %c12_i32 = arith.constant 12 : i32
    %83 = arith.truncf %82 : vector<8x128xf32> to vector<8x128xbf16>
    %cst_29 = arith.constant dense<0.000000e+00> : vector<8x128xf32>
    %84 = tpu.matmul %83, %4, %cst_29 {dimension_numbers = #tpu.dot_dimension_numbers<[1], [0], [0], [1], [0, 0, 1, 1], [], []>} : vector<8x128xbf16>, vector<128x128xbf16>, vector<8x128xf32> -> vector<8x128xf32>
    %85 = vector.broadcast %5 : vector<1x128xf32> to vector<8x128xf32>
    %86 = arith.addf %84, %85 : vector<8x128xf32>
    %c13_i32 = arith.constant 13 : i32
    %87 = arith.truncf %86 : vector<8x128xf32> to vector<8x128xbf16>
    %cst_30 = arith.constant dense<0.000000e+00> : vector<8x128xf32>
    %88 = tpu.matmul %87, %4, %cst_30 {dimension_numbers = #tpu.dot_dimension_numbers<[1], [0], [0], [1], [0, 0, 1, 1], [], []>} : vector<8x128xbf16>, vector<128x128xbf16>, vector<8x128xf32> -> vector<8x128xf32>
    %89 = vector.broadcast %5 : vector<1x128xf32> to vector<8x128xf32>
    %90 = arith.addf %88, %89 : vector<8x128xf32>
    %c14_i32 = arith.constant 14 : i32
    %91 = arith.truncf %90 : vector<8x128xf32> to vector<8x128xbf16>
    %cst_31 = arith.constant dense<0.000000e+00> : vector<8x128xf32>
    %92 = tpu.matmul %91, %4, %cst_31 {dimension_numbers = #tpu.dot_dimension_numbers<[1], [0], [0], [1], [0, 0, 1, 1], [], []>} : vector<8x128xbf16>, vector<128x128xbf16>, vector<8x128xf32> -> vector<8x128xf32>
    %93 = vector.broadcast %5 : vector<1x128xf32> to vector<8x128xf32>
    %94 = arith.addf %92, %93 : vector<8x128xf32>
    %c15_i32 = arith.constant 15 : i32
    %95 = arith.truncf %94 : vector<8x128xf32> to vector<8x128xbf16>
    %cst_32 = arith.constant dense<0.000000e+00> : vector<8x128xf32>
    %96 = tpu.matmul %95, %4, %cst_32 {dimension_numbers = #tpu.dot_dimension_numbers<[1], [0], [0], [1], [0, 0, 1, 1], [], []>} : vector<8x128xbf16>, vector<128x128xbf16>, vector<8x128xf32> -> vector<8x128xf32>
    %97 = vector.broadcast %5 : vector<1x128xf32> to vector<8x128xf32>
    %98 = arith.addf %96, %97 : vector<8x128xf32>
    %c16_i32 = arith.constant 16 : i32
    %99 = arith.truncf %98 : vector<8x128xf32> to vector<8x128xbf16>
    %cst_33 = arith.constant dense<0.000000e+00> : vector<8x128xf32>
    %100 = tpu.matmul %99, %4, %cst_33 {dimension_numbers = #tpu.dot_dimension_numbers<[1], [0], [0], [1], [0, 0, 1, 1], [], []>} : vector<8x128xbf16>, vector<128x128xbf16>, vector<8x128xf32> -> vector<8x128xf32>
    %101 = vector.broadcast %5 : vector<1x128xf32> to vector<8x128xf32>
    %102 = arith.addf %100, %101 : vector<8x128xf32>
    %c17_i32 = arith.constant 17 : i32
    %103 = arith.truncf %102 : vector<8x128xf32> to vector<8x128xbf16>
    %cst_34 = arith.constant dense<0.000000e+00> : vector<8x128xf32>
    %104 = tpu.matmul %103, %4, %cst_34 {dimension_numbers = #tpu.dot_dimension_numbers<[1], [0], [0], [1], [0, 0, 1, 1], [], []>} : vector<8x128xbf16>, vector<128x128xbf16>, vector<8x128xf32> -> vector<8x128xf32>
    %105 = vector.broadcast %5 : vector<1x128xf32> to vector<8x128xf32>
    %106 = arith.addf %104, %105 : vector<8x128xf32>
    %c18_i32 = arith.constant 18 : i32
    %107 = arith.truncf %106 : vector<8x128xf32> to vector<8x128xbf16>
    %cst_35 = arith.constant dense<0.000000e+00> : vector<8x128xf32>
    %108 = tpu.matmul %107, %4, %cst_35 {dimension_numbers = #tpu.dot_dimension_numbers<[1], [0], [0], [1], [0, 0, 1, 1], [], []>} : vector<8x128xbf16>, vector<128x128xbf16>, vector<8x128xf32> -> vector<8x128xf32>
    %109 = vector.broadcast %5 : vector<1x128xf32> to vector<8x128xf32>
    %110 = arith.addf %108, %109 : vector<8x128xf32>
    %c19_i32 = arith.constant 19 : i32
    %111 = arith.truncf %110 : vector<8x128xf32> to vector<8x128xbf16>
    %cst_36 = arith.constant dense<0.000000e+00> : vector<8x128xf32>
    %112 = tpu.matmul %111, %4, %cst_36 {dimension_numbers = #tpu.dot_dimension_numbers<[1], [0], [0], [1], [0, 0, 1, 1], [], []>} : vector<8x128xbf16>, vector<128x128xbf16>, vector<8x128xf32> -> vector<8x128xf32>
    %113 = vector.broadcast %5 : vector<1x128xf32> to vector<8x128xf32>
    %114 = arith.addf %112, %113 : vector<8x128xf32>
    %115 = arith.mulf %114, %114 : vector<8x128xf32>
    %cst_37 = arith.constant dense<0.000000e+00> : vector<8xf32>
    %116 = vector.multi_reduction <add>, %115, %cst_37 [1] : vector<8x128xf32> to vector<8xf32>
    %117 = vector.shape_cast %116 : vector<8xf32> to vector<8x1xf32>
    %cst_38 = arith.constant 3.125000e-02 : f32
    %118 = vector.broadcast %cst_38 : f32 to vector<8x1xf32>
    %119 = arith.mulf %117, %118 : vector<8x1xf32>
    %120 = math.sqrt %119 : vector<8x1xf32>
    %cst_39 = arith.constant 9.99999993E-9 : f32
    %121 = vector.broadcast %cst_39 : f32 to vector<8x1xf32>
    %122 = arith.addf %120, %121 : vector<8x1xf32>
    %cst_40 = arith.constant 1.000000e+00 : f32
    %123 = vector.broadcast %cst_40 : f32 to vector<8x1xf32>
    %124 = arith.divf %123, %122 : vector<8x1xf32>
    %125 = vector.broadcast %124 : vector<8x1xf32> to vector<8x128xf32>
    %126 = arith.mulf %114, %125 : vector<8x128xf32>
    %127 = arith.truncf %126 : vector<8x128xf32> to vector<8x128xbf16>
    %c0_41 = arith.constant 0 : index
    %c0_42 = arith.constant 0 : index
    %128 = vector.load %arg6[%c0_41, %c0_42] : memref<8x128xbf16, #tpu.memory_space<vmem>>, vector<8x128xbf16>
    tpu.vector_store %arg6[%c0_41, %c0_42], %127 {strides = array<i32>} : memref<8x128xbf16, #tpu.memory_space<vmem>>, vector<8x128xbf16>,
    return
  }
  func.func @transform_0(%arg0: i32) -> (i32, i32) {
    %c0_i32 = arith.constant 0 : i32
    %c0_i32_0 = arith.constant 0 : i32
    return %arg0, %c0_i32 : i32, i32
  }
  func.func @transform_1(%arg0: i32) -> (i32, i32) {
    %c0_i32 = arith.constant 0 : i32
    %c0_i32_0 = arith.constant 0 : i32
    %c0_i32_1 = arith.constant 0 : i32
    return %c0_i32, %c0_i32_0 : i32, i32
  }
  func.func @transform_2(%arg0: i32) -> (i32, i32) {
    %c0_i32 = arith.constant 0 : i32
    %c0_i32_0 = arith.constant 0 : i32
    %c0_i32_1 = arith.constant 0 : i32
    return %c0_i32, %c0_i32_0 : i32, i32
  }
  func.func @transform_3(%arg0: i32) -> (i32, i32) {
    %c0_i32 = arith.constant 0 : i32
    %c0_i32_0 = arith.constant 0 : i32
    %c0_i32_1 = arith.constant 0 : i32
    return %c0_i32, %c0_i32_0 : i32, i32
  }
  func.func @transform_4(%arg0: i32) -> (i32, i32) {
    %c0_i32 = arith.constant 0 : i32
    %c0_i32_0 = arith.constant 0 : i32
    %c0_i32_1 = arith.constant 0 : i32
    return %c0_i32, %c0_i32_0 : i32, i32
  }
  func.func @transform_5(%arg0: i32) -> (i32, i32) {
    %c0_i32 = arith.constant 0 : i32
    %c0_i32_0 = arith.constant 0 : i32
    return %arg0, %c0_i32 : i32, i32
  }
}

</mosaic_0001>

<llo_original>
// kernel: tpu_custom_call.1
$region0: #{tpu_custom_call.1}
  #allocation0 [shape = 'u32[]', space=smem, size = 0x4, offset = 0x4, fixed_abs, tag = 'smem constant byte address 0x4 - core index']
  #allocation1 [shape = 'u32[144,128]{1,0:T(1,128)}', space=vmem, size = 0x12000, scoped, tag = 'internal scratch']
  %s0 = inlined_call_operand.hbm [shape: f32[8,128], index: 0, kind: input, shape index: {}]
  %s1 = inlined_call_operand.hbm [shape: f32[8,128], index: 1, kind: output, shape index: {}]
  %s2 = sld [smem:[#allocation0]]
  $region18: #{tpu_custom_call.1} parent=0
    _
  %s4 = ssub.s32 1, %s2
  %s5 = scalar_select 0, %s4, %s2
  $region1: #{tpu_custom_call.1} parent=0
    #allocation2 [shape = 'u8[4096]{0}', space=vmem, size = 0x1000, scoped, tag = 'input window, operand 0, single buffered']
    #allocation3 [shape = 's32[1]{0}', space=sflag, size = 0x4, scoped, tag = 'scoped memory for tpu_custom_call.1']
    #allocation4 [shape = 's32[1]{0}', space=sflag, size = 0x4, scoped, tag = 'scoped memory for tpu_custom_call.1']
    #allocation5 [shape = 'u8[4096]{0}', space=vmem, size = 0x1000, scoped, tag = 'output window, operand 0, single buffered']
    %6 = vsyncpa [#allocation3], 0
    %7 = vsyncpa [#allocation4], 0
    // Predicated region
    $region2: #{tpu_custom_call.1} parent=1 // pred_check
      _
    $region3: #{tpu_custom_call.1} parent=1 // pred_check_branch
      %9 = sbr.rel (0) target = $region5
    $region4: #{tpu_custom_call.1} parent=1 // pred_region
      %s11 = ssub.s32 128, 128
      %12 = vsyncadd [#allocation3], %s11
      %s14 = sshll.u32 [#allocation2], 4
      %s15 = int_to_ptr.vmem [resolvable:$true] %s14
      %17 = dma.hbm_to_vmem [thread:$0]  %s0, 128, %s15, [#allocation3]
    $region5: #{tpu_custom_call.1} parent=1 // pred_fallthru
      _
    // Predicated region
    $region6: #{tpu_custom_call.1} parent=1 // pred_check
      _
    $region7: #{tpu_custom_call.1} parent=1 // pred_check_branch
      %19 = sbr.rel (0) target = $region9
    $region8: #{tpu_custom_call.1} parent=1 // pred_region
      %20 = dma.done [#allocation3], 128
    $region9: #{tpu_custom_call.1} parent=1 // pred_fallthru
      _
    %v21 = vld [vmem:[#allocation2] sm:$0xff]
    %v22 = vmul.f32 %v21, 2.0
    %23 = vst [vmem:[#allocation5] sm:$0xff] %v22
    // Predicated region
    $region10: #{tpu_custom_call.1} parent=1 // pred_check
      _
    $region11: #{tpu_custom_call.1} parent=1 // pred_check_branch
      %25 = sbr.rel (0) target = $region13
    $region12: #{tpu_custom_call.1} parent=1 // pred_region
      %s27 = ssub.s32 128, 128
      %28 = vsyncadd [#allocation4], %s27
      %s30 = sshll.u32 [#allocation5], 4
      %s31 = int_to_ptr.vmem [resolvable:$true] %s30
      %33 = dma.vmem_to_hbm [thread:$0]  %s31, 128, %s1, [#allocation4]
    $region13: #{tpu_custom_call.1} parent=1 // pred_fallthru
      _
    // Predicated region
    $region14: #{tpu_custom_call.1} parent=1 // pred_check
      _
    $region15: #{tpu_custom_call.1} parent=1 // pred_check_branch
      %35 = sbr.rel (0) target = $region17
    $region16: #{tpu_custom_call.1} parent=1 // pred_region
      %36 = dma.done [#allocation4], 128
    $region17: #{tpu_custom_call.1} parent=1 // pred_fallthru
      _
    %37 = vsyncpa [#allocation3], 1
    %38 = vsyncpa [#allocation4], 1

// kernel: tpu_custom_call.1
$region0: #{tpu_custom_call.1}
  #allocation0 [shape = 'u32[]', space=smem, size = 0x4, offset = 0x4, fixed_abs, tag = 'smem constant byte address 0x4 - core index']
  #allocation1 [shape = 'u32[144,128]{1,0:T(1,128)}', space=vmem, size = 0x12000, scoped, tag = 'internal scratch']
  %s0 = inlined_call_operand.hbm [shape: bf16[8,128], index: 0, kind: input, shape index: {}]
  %s1 = inlined_call_operand.hbm [shape: bf16[128,128], index: 1, kind: input, shape index: {}]
  %s2 = inlined_call_operand.vmem [shape: f32[1,128], index: 2, kind: input, shape index: {}]
  %s3 = inlined_call_operand.hbm [shape: bf16[128,128], index: 3, kind: input, shape index: {}]
  %s4 = inlined_call_operand.vmem [shape: f32[1,128], index: 4, kind: input, shape index: {}]
  %s5 = inlined_call_operand.hbm [shape: bf16[8,128], index: 5, kind: output, shape index: {}]
  %s6 = sld [smem:[#allocation0]]
  $region42: #{tpu_custom_call.1} parent=0
    _
  %s8 = ssub.s32 1, %s6
  %s9 = scalar_select 0, %s8, %s6
  $region1: #{tpu_custom_call.1} parent=0
    #allocation2 [shape = 'u8[2048]{0}', space=vmem, size = 0x800, scoped, tag = 'input window, operand 0, single buffered']
    #allocation3 [shape = 's32[1]{0}', space=sflag, size = 0x4, scoped, tag = 'scoped memory for tpu_custom_call.1']
    #allocation4 [shape = 's32[1]{0}', space=sflag, size = 0x4, scoped, tag = 'scoped memory for tpu_custom_call.1']
    #allocation5 [shape = 'u8[32768]{0}', space=vmem, size = 0x8000, scoped, tag = 'input window, operand 1, single buffered']
    #allocation6 [shape = 's32[1]{0}', space=sflag, size = 0x4, scoped, tag = 'scoped memory for tpu_custom_call.1']
    #allocation7 [shape = 'u8[32768]{0}', space=vmem, size = 0x8000, scoped, tag = 'input window, operand 3, single buffered']
    #allocation8 [shape = 'u8[2048]{0}', space=vmem, size = 0x800, scoped, tag = 'output window, operand 0, single buffered']
    %10 = vsyncpa [#allocation3], 0
    %11 = vsyncpa [#allocation6], 0
    %12 = vsyncpa [#allocation4], 0
    // Predicated region
    $region2: #{tpu_custom_call.1} parent=1 // pred_check
      _
    $region3: #{tpu_custom_call.1} parent=1 // pred_check_branch
      %14 = sbr.rel (0) target = $region5
    $region4: #{tpu_custom_call.1} parent=1 // pred_region
      %s16 = ssub.s32 64, 64
      %17 = vsyncadd [#allocation3], %s16
      %s19 = sshll.u32 [#allocation2], 4
      %s20 = int_to_ptr.vmem [resolvable:$true] %s19
      %22 = dma.hbm_to_vmem [thread:$0]  %s0, 64, %s20, [#allocation3]
    $region5: #{tpu_custom_call.1} parent=1 // pred_fallthru
      _
    // Predicated region
    $region6: #{tpu_custom_call.1} parent=1 // pred_check
      _
    $region7: #{tpu_custom_call.1} parent=1 // pred_check_branch
      %24 = sbr.rel (0) target = $region9
    $region8: #{tpu_custom_call.1} parent=1 // pred_region
      %s26 = ssub.s32 1024, 1024
      %27 = vsyncadd [#allocation6], %s26
      %s28 = sshll.u32 [#allocation5], 4
      %s29 = int_to_ptr.vmem [resolvable:$true] %s28
      %34 = dma.hbm_to_vmem [thread:$0]  %s1, 1024, %s29, [#allocation6], 64, 64, 4
    $region9: #{tpu_custom_call.1} parent=1 // pred_fallthru
      _
    // Predicated region
    $region10: #{tpu_custom_call.1} parent=1 // pred_check
      _
    $region11: #{tpu_custom_call.1} parent=1 // pred_check_branch
      %36 = sbr.rel (0) target = $region13
    $region12: #{tpu_custom_call.1} parent=1 // pred_region
      _
    $region13: #{tpu_custom_call.1} parent=1 // pred_fallthru
      _
    // Predicated region
    $region14: #{tpu_custom_call.1} parent=1 // pred_check
      _
    $region15: #{tpu_custom_call.1} parent=1 // pred_check_branch
      %38 = sbr.rel (0) target = $region17
    $region16: #{tpu_custom_call.1} parent=1 // pred_region
      %s40 = ssub.s32 1024, 1024
      %41 = vsyncadd [#allocation6], %s40
      %s42 = sshll.u32 [#allocation7], 4
      %s43 = int_to_ptr.vmem [resolvable:$true] %s42
      %48 = dma.hbm_to_vmem [thread:$0]  %s3, 1024, %s43, [#allocation6], 64, 64, 4
    $region17: #{tpu_custom_call.1} parent=1 // pred_fallthru
      _
    // Predicated region
    $region18: #{tpu_custom_call.1} parent=1 // pred_check
      _
    $region19: #{tpu_custom_call.1} parent=1 // pred_check_branch
      %50 = sbr.rel (0) target = $region21
    $region20: #{tpu_custom_call.1} parent=1 // pred_region
      _
    $region21: #{tpu_custom_call.1} parent=1 // pred_fallthru
      _
    // Predicated region
    $region22: #{tpu_custom_call.1} parent=1 // pred_check
      _
    $region23: #{tpu_custom_call.1} parent=1 // pred_check_branch
      %52 = sbr.rel (0) target = $region25
    $region24: #{tpu_custom_call.1} parent=1 // pred_region
      %53 = dma.done [#allocation3], 64
    $region25: #{tpu_custom_call.1} parent=1 // pred_fallthru
      _
    // Predicated region
    $region26: #{tpu_custom_call.1} parent=1 // pred_check
      _
    $region27: #{tpu_custom_call.1} parent=1 // pred_check_branch
      %55 = sbr.rel (0) target = $region29
    $region28: #{tpu_custom_call.1} parent=1 // pred_region
      %56 = dma.done [#allocation6], 1024
    $region29: #{tpu_custom_call.1} parent=1 // pred_fallthru
      _
    // Predicated region
    $region30: #{tpu_custom_call.1} parent=1 // pred_check
      _
    $region31: #{tpu_custom_call.1} parent=1 // pred_check_branch
      %58 = sbr.rel (0) target = $region33
    $region32: #{tpu_custom_call.1} parent=1 // pred_region
      %59 = dma.done [#allocation6], 1024
    $region33: #{tpu_custom_call.1} parent=1 // pred_fallthru
      _
    %v61 = vld [vmem:[#allocation2] sm:$0xf]
    %v62 = vld [vmem:[#allocation5] sm:$0xf]
    %v63 = vld [vmem:[#allocation5 + $0x4] sm:$0xf]
    %v64 = vld [vmem:[#allocation5 + $0x8] sm:$0xf]
    %v65 = vld [vmem:[#allocation5 + $0xc] sm:$0xf]
    %v66 = vld [vmem:[#allocation5 + $0x10] sm:$0xf]
    %v67 = vld [vmem:[#allocation5 + $0x14] sm:$0xf]
    %v68 = vld [vmem:[#allocation5 + $0x18] sm:$0xf]
    %v69 = vld [vmem:[#allocation5 + $0x1c] sm:$0xf]
    %v70 = vld [vmem:[#allocation5 + $0x20] sm:$0xf]
    %v71 = vld [vmem:[#allocation5 + $0x24] sm:$0xf]
    %v72 = vld [vmem:[#allocation5 + $0x28] sm:$0xf]
    %v73 = vld [vmem:[#allocation5 + $0x2c] sm:$0xf]
    %v74 = vld [vmem:[#allocation5 + $0x30] sm:$0xf]
    %v75 = vld [vmem:[#allocation5 + $0x34] sm:$0xf]
    %v76 = vld [vmem:[#allocation5 + $0x38] sm:$0xf]
    %v77 = vld [vmem:[#allocation5 + $0x3c] sm:$0xf]
    %v78 = vld [vmem:[%s2] sm:$0x1]
    %v79 = vld [vmem:[#allocation7] sm:$0xf]
    %v80 = vld [vmem:[#allocation7 + $0x4] sm:$0xf]
    %v81 = vld [vmem:[#allocation7 + $0x8] sm:$0xf]
    %v82 = vld [vmem:[#allocation7 + $0xc] sm:$0xf]
    %v83 = vld [vmem:[#allocation7 + $0x10] sm:$0xf]
    %v84 = vld [vmem:[#allocation7 + $0x14] sm:$0xf]
    %v85 = vld [vmem:[#allocation7 + $0x18] sm:$0xf]
    %v86 = vld [vmem:[#allocation7 + $0x1c] sm:$0xf]
    %v87 = vld [vmem:[#allocation7 + $0x20] sm:$0xf]
    %v88 = vld [vmem:[#allocation7 + $0x24] sm:$0xf]
    %v89 = vld [vmem:[#allocation7 + $0x28] sm:$0xf]
    %v90 = vld [vmem:[#allocation7 + $0x2c] sm:$0xf]
    %v91 = vld [vmem:[#allocation7 + $0x30] sm:$0xf]
    %v92 = vld [vmem:[#allocation7 + $0x34] sm:$0xf]
    %v93 = vld [vmem:[#allocation7 + $0x38] sm:$0xf]
    %v94 = vld [vmem:[#allocation7 + $0x3c] sm:$0xf]
    %v95 = vld [vmem:[%s4] sm:$0x1]
    %v97 = vlaneseq
    %v98 = vshrl.u32 %v97, 7
    %v99 = vsub.s32 0, %v98
    %v100 = vrot.slane %v78, %v99
    %v118 = vunpack.c.l.b16 %v62
    %v119 = vunpack.c.l.b16 %v63
    %v120 = vunpack.c.l.b16 %v64
    %v121 = vunpack.c.l.b16 %v65
    %v122 = vunpack.c.l.b16 %v66
    %v123 = vunpack.c.l.b16 %v67
    %v124 = vunpack.c.l.b16 %v68
    %v125 = vunpack.c.l.b16 %v69
    %v126 = vunpack.c.l.b16 %v70
    %v127 = vunpack.c.l.b16 %v71
    %v128 = vunpack.c.l.b16 %v72
    %v129 = vunpack.c.l.b16 %v73
    %v130 = vunpack.c.l.b16 %v74
    %v131 = vunpack.c.l.b16 %v75
    %v132 = vunpack.c.l.b16 %v76
    %v133 = vunpack.c.l.b16 %v77
    %v134 = vpack.c.b16 %v119, %v118
    %v135 = vpack.c.b16 %v121, %v120
    %v136 = vpack.c.b16 %v123, %v122
    %v137 = vpack.c.b16 %v125, %v124
    %v138 = vpack.c.b16 %v127, %v126
    %v139 = vpack.c.b16 %v129, %v128
    %v140 = vpack.c.b16 %v131, %v130
    %v141 = vpack.c.b16 %v133, %v132
    %150 = vmatprep.subr.bf16.mxu0 0
    %151 = vmatpush1.bf16.msra.mxu0 %v134
    %152 = vmatprep.subr.bf16.mxu0 0
    %153 = vmatpush1.bf16.msra.mxu0 %v135
    %154 = vmatprep.subr.bf16.mxu0 0
    %155 = vmatpush1.bf16.msra.mxu0 %v136
    %156 = vmatprep.subr.bf16.mxu0 0
    %157 = vmatpush1.bf16.msra.mxu0 %v137
    %158 = vmatprep.subr.bf16.mxu0 0
    %159 = vmatpush1.bf16.msra.mxu0 %v138
    %160 = vmatprep.subr.bf16.mxu0 0
    %161 = vmatpush1.bf16.msra.mxu0 %v139
    %162 = vmatprep.subr.bf16.mxu0 0
    %163 = vmatpush1.bf16.msra.mxu0 %v140
    %164 = vmatprep.subr.bf16.mxu0 0
    %165 = vmatpush1.bf16.msra.mxu0 %v141
    %166 = vmatprep.subr.bf16.mxu0 0
    %167 = vmatpush1.bf16.msra.mxu0 0
    %168 = vmatprep.subr.bf16.mxu0 0
    %169 = vmatpush1.bf16.msra.mxu0 0
    %170 = vmatprep.subr.bf16.mxu0 0
    %171 = vmatpush1.bf16.msra.mxu0 0
    %172 = vmatprep.subr.bf16.mxu0 0
    %173 = vmatpush1.bf16.msra.mxu0 0
    %174 = vmatprep.subr.bf16.mxu0 0
    %175 = vmatpush1.bf16.msra.mxu0 0
    %176 = vmatprep.subr.bf16.mxu0 0
    %177 = vmatpush1.bf16.msra.mxu0 0
    %178 = vmatprep.subr.bf16.mxu0 0
    %179 = vmatpush1.bf16.msra.mxu0 0
    %180 = vmatprep.subr.bf16.mxu0 0
    %181 = vmatpush1.bf16.msra.mxu0 0
    %182 = vmatprep.mubr.bf16.mxu0 0
    %183 = vmatmul.mubr.bf16.gmra.mrb[0].mxu0 %v61
    %v184 = vpop.f32.mrb[0].mxu0
    %v185 = vadd.f32 %v100, %v184
    %v186 = vpop.f32.mrb[0].mxu0
    %v187 = vpop.f32.mrb[0].mxu0
    %v188 = vpop.f32.mrb[0].mxu0
    %189 = vdwg.mxu0
    %v190 = vlaneseq
    %v191 = vand.u32 %v190, 127
    %vm192 = vcmp.lt.s32.totalorder %v191, 32
    %v193 = vmax.f32 %v185, -80.0
    %v194 = vsub.f32 0.0, %v193
    %v195 = vmul.f32 %v194, 1.442695
    %v196 = vpow.pop %v195
    %v197 = vadd.f32 %v196, 1.0
    %v198 = vrcp.pop %v197
    %v199 = vmul.f32 %v185, %v198
    %v200 = vsel %vm192, %v199, -1e+30
    %201 = vmax.xlane.f32.xlu0 %v200
    %v202 = vpop.xlane.xlu0 %201
    %v203 = vsub.f32 %v200, %v202
    %v204 = vmul.f32 %v203, 1.442695
    %v205 = vpow.pop %v204
    %v206 = vsel %vm192, %v205, 0.0
    %207 = vadd.xlane.f32.xlu0 %v206
    %v208 = vpop.xlane.xlu0 %207
    %v209 = vrcp.pop %v208
    %v210 = vmul.f32 1.0, %v209
    %v211 = vmul.f32 %v206, %v210
    %v212 = vpack.c.bf16 %v211, %v211
    %v214 = vlaneseq
    %v215 = vshrl.u32 %v214, 7
    %v216 = vsub.s32 0, %v215
    %v217 = vrot.slane %v95, %v216
    %v235 = vunpack.c.l.b16 %v79
    %v236 = vunpack.c.l.b16 %v80
    %v237 = vunpack.c.l.b16 %v81
    %v238 = vunpack.c.l.b16 %v82
    %v239 = vunpack.c.l.b16 %v83
    %v240 = vunpack.c.l.b16 %v84
    %v241 = vunpack.c.l.b16 %v85
    %v242 = vunpack.c.l.b16 %v86
    %v243 = vunpack.c.l.b16 %v87
    %v244 = vunpack.c.l.b16 %v88
    %v245 = vunpack.c.l.b16 %v89
    %v246 = vunpack.c.l.b16 %v90
    %v247 = vunpack.c.l.b16 %v91
    %v248 = vunpack.c.l.b16 %v92
    %v249 = vunpack.c.l.b16 %v93
    %v250 = vunpack.c.l.b16 %v94
    %v251 = vpack.c.b16 %v236, %v235
    %v252 = vpack.c.b16 %v238, %v237
    %v253 = vpack.c.b16 %v240, %v239
    %v254 = vpack.c.b16 %v242, %v241
    %v255 = vpack.c.b16 %v244, %v243
    %v256 = vpack.c.b16 %v246, %v245
    %v257 = vpack.c.b16 %v248, %v247
    %v258 = vpack.c.b16 %v250, %v249
    %267 = vmatprep.subr.bf16.mxu0 0
    %268 = vmatpush1.bf16.msra.mxu0 %v251
    %269 = vmatprep.subr.bf16.mxu0 0
    %270 = vmatpush1.bf16.msra.mxu0 %v252
    %271 = vmatprep.subr.bf16.mxu0 0
    %272 = vmatpush1.bf16.msra.mxu0 %v253
    %273 = vmatprep.subr.bf16.mxu0 0
    %274 = vmatpush1.bf16.msra.mxu0 %v254
    %275 = vmatprep.subr.bf16.mxu0 0
    %276 = vmatpush1.bf16.msra.mxu0 %v255
    %277 = vmatprep.subr.bf16.mxu0 0
    %278 = vmatpush1.bf16.msra.mxu0 %v256
    %279 = vmatprep.subr.bf16.mxu0 0
    %280 = vmatpush1.bf16.msra.mxu0 %v257
    %281 = vmatprep.subr.bf16.mxu0 0
    %282 = vmatpush1.bf16.msra.mxu0 %v258
    %283 = vmatprep.subr.bf16.mxu0 0
    %284 = vmatpush1.bf16.msra.mxu0 0
    %285 = vmatprep.subr.bf16.mxu0 0
    %286 = vmatpush1.bf16.msra.mxu0 0
    %287 = vmatprep.subr.bf16.mxu0 0
    %288 = vmatpush1.bf16.msra.mxu0 0
    %289 = vmatprep.subr.bf16.mxu0 0
    %290 = vmatpush1.bf16.msra.mxu0 0
    %291 = vmatprep.subr.bf16.mxu0 0
    %292 = vmatpush1.bf16.msra.mxu0 0
    %293 = vmatprep.subr.bf16.mxu0 0
    %294 = vmatpush1.bf16.msra.mxu0 0
    %295 = vmatprep.subr.bf16.mxu0 0
    %296 = vmatpush1.bf16.msra.mxu0 0
    %297 = vmatprep.subr.bf16.mxu0 0
    %298 = vmatpush1.bf16.msra.mxu0 0
    %299 = vmatprep.mubr.bf16.mxu0 0
    %300 = vmatmul.mubr.bf16.gmra.mrb[0].mxu0 %v212
    %v301 = vpop.f32.mrb[0].mxu0
    %v302 = vadd.f32 %v217, %v301
    %v303 = vpop.f32.mrb[0].mxu0
    %v304 = vpop.f32.mrb[0].mxu0
    %v305 = vpop.f32.mrb[0].mxu0
    %306 = vdwg.mxu0
    %v307 = vpack.c.bf16 %v302, %v302
    %308 = vmatprep.subr.bf16.mxu0 0
    %309 = vmatpush1.bf16.msra.mxu0 %v251
    %310 = vmatprep.subr.bf16.mxu0 0
    %311 = vmatpush1.bf16.msra.mxu0 %v252
    %312 = vmatprep.subr.bf16.mxu0 0
    %313 = vmatpush1.bf16.msra.mxu0 %v253
    %314 = vmatprep.subr.bf16.mxu0 0
    %315 = vmatpush1.bf16.msra.mxu0 %v254
    %316 = vmatprep.subr.bf16.mxu0 0
    %317 = vmatpush1.bf16.msra.mxu0 %v255
    %318 = vmatprep.subr.bf16.mxu0 0
    %319 = vmatpush1.bf16.msra.mxu0 %v256
    %320 = vmatprep.subr.bf16.mxu0 0
    %321 = vmatpush1.bf16.msra.mxu0 %v257
    %322 = vmatprep.subr.bf16.mxu0 0
    %323 = vmatpush1.bf16.msra.mxu0 %v258
    %324 = vmatprep.subr.bf16.mxu0 0
    %325 = vmatpush1.bf16.msra.mxu0 0
    %326 = vmatprep.subr.bf16.mxu0 0
    %327 = vmatpush1.bf16.msra.mxu0 0
    %328 = vmatprep.subr.bf16.mxu0 0
    %329 = vmatpush1.bf16.msra.mxu0 0
    %330 = vmatprep.subr.bf16.mxu0 0
    %331 = vmatpush1.bf16.msra.mxu0 0
    %332 = vmatprep.subr.bf16.mxu0 0
    %333 = vmatpush1.bf16.msra.mxu0 0
    %334 = vmatprep.subr.bf16.mxu0 0
    %335 = vmatpush1.bf16.msra.mxu0 0
    %336 = vmatprep.subr.bf16.mxu0 0
    %337 = vmatpush1.bf16.msra.mxu0 0
    %338 = vmatprep.subr.bf16.mxu0 0
    %339 = vmatpush1.bf16.msra.mxu0 0
    %340 = vmatprep.mubr.bf16.mxu0 0
    %341 = vmatmul.mubr.bf16.gmra.mrb[0].mxu0 %v307
    %v342 = vpop.f32.mrb[0].mxu0
    %v343 = vadd.f32 %v217, %v342
    %v344 = vpop.f32.mrb[0].mxu0
    %v345 = vpop.f32.mrb[0].mxu0
    %v346 = vpop.f32.mrb[0].mxu0
    %347 = vdwg.mxu0
    %v348 = vpack.c.bf16 %v343, %v343
    %349 = vmatprep.subr.bf16.mxu0 0
    %350 = vmatpush1.bf16.msra.mxu0 %v251
    %351 = vmatprep.subr.bf16.mxu0 0
    %352 = vmatpush1.bf16.msra.mxu0 %v252
    %353 = vmatprep.subr.bf16.mxu0 0
    %354 = vmatpush1.bf16.msra.mxu0 %v253
    %355 = vmatprep.subr.bf16.mxu0 0
    %356 = vmatpush1.bf16.msra.mxu0 %v254
    %357 = vmatprep.subr.bf16.mxu0 0
    %358 = vmatpush1.bf16.msra.mxu0 %v255
    %359 = vmatprep.subr.bf16.mxu0 0
    %360 = vmatpush1.bf16.msra.mxu0 %v256
    %361 = vmatprep.subr.bf16.mxu0 0
    %362 = vmatpush1.bf16.msra.mxu0 %v257
    %363 = vmatprep.subr.bf16.mxu0 0
    %364 = vmatpush1.bf16.msra.mxu0 %v258
    %365 = vmatprep.subr.bf16.mxu0 0
    %366 = vmatpush1.bf16.msra.mxu0 0
    %367 = vmatprep.subr.bf16.mxu0 0
    %368 = vmatpush1.bf16.msra.mxu0 0
    %369 = vmatprep.subr.bf16.mxu0 0
    %370 = vmatpush1.bf16.msra.mxu0 0
    %371 = vmatprep.subr.bf16.mxu0 0
    %372 = vmatpush1.bf16.msra.mxu0 0
    %373 = vmatprep.subr.bf16.mxu0 0
    %374 = vmatpush1.bf16.msra.mxu0 0
    %375 = vmatprep.subr.bf16.mxu0 0
    %376 = vmatpush1.bf16.msra.mxu0 0
    %377 = vmatprep.subr.bf16.mxu0 0
    %378 = vmatpush1.bf16.msra.mxu0 0
    %379 = vmatprep.subr.bf16.mxu0 0
    %380 = vmatpush1.bf16.msra.mxu0 0
    %381 = vmatprep.mubr.bf16.mxu0 0
    %382 = vmatmul.mubr.bf16.gmra.mrb[0].mxu0 %v348
    %v383 = vpop.f32.mrb[0].mxu0
    %v384 = vadd.f32 %v217, %v383
    %v385 = vpop.f32.mrb[0].mxu0
    %v386 = vpop.f32.mrb[0].mxu0
    %v387 = vpop.f32.mrb[0].mxu0
    %388 = vdwg.mxu0
    %v389 = vpack.c.bf16 %v384, %v384
    %390 = vmatprep.subr.bf16.mxu0 0
    %391 = vmatpush1.bf16.msra.mxu0 %v251
    %392 = vmatprep.subr.bf16.mxu0 0
    %393 = vmatpush1.bf16.msra.mxu0 %v252
    %394 = vmatprep.subr.bf16.mxu0 0
    %395 = vmatpush1.bf16.msra.mxu0 %v253
    %396 = vmatprep.subr.bf16.mxu0 0
    %397 = vmatpush1.bf16.msra.mxu0 %v254
    %398 = vmatprep.subr.bf16.mxu0 0
    %399 = vmatpush1.bf16.msra.mxu0 %v255
    %400 = vmatprep.subr.bf16.mxu0 0
    %401 = vmatpush1.bf16.msra.mxu0 %v256
    %402 = vmatprep.subr.bf16.mxu0 0
    %403 = vmatpush1.bf16.msra.mxu0 %v257
    %404 = vmatprep.subr.bf16.mxu0 0
    %405 = vmatpush1.bf16.msra.mxu0 %v258
    %406 = vmatprep.subr.bf16.mxu0 0
    %407 = vmatpush1.bf16.msra.mxu0 0
    %408 = vmatprep.subr.bf16.mxu0 0
    %409 = vmatpush1.bf16.msra.mxu0 0
    %410 = vmatprep.subr.bf16.mxu0 0
    %411 = vmatpush1.bf16.msra.mxu0 0
    %412 = vmatprep.subr.bf16.mxu0 0
    %413 = vmatpush1.bf16.msra.mxu0 0
    %414 = vmatprep.subr.bf16.mxu0 0
    %415 = vmatpush1.bf16.msra.mxu0 0
    %416 = vmatprep.subr.bf16.mxu0 0
    %417 = vmatpush1.bf16.msra.mxu0 0
    %418 = vmatprep.subr.bf16.mxu0 0
    %419 = vmatpush1.bf16.msra.mxu0 0
    %420 = vmatprep.subr.bf16.mxu0 0
    %421 = vmatpush1.bf16.msra.mxu0 0
    %422 = vmatprep.mubr.bf16.mxu0 0
    %423 = vmatmul.mubr.bf16.gmra.mrb[0].mxu0 %v389
    %v424 = vpop.f32.mrb[0].mxu0
    %v425 = vadd.f32 %v217, %v424
    %v426 = vpop.f32.mrb[0].mxu0
    %v427 = vpop.f32.mrb[0].mxu0
    %v428 = vpop.f32.mrb[0].mxu0
    %429 = vdwg.mxu0
    %v430 = vpack.c.bf16 %v425, %v425
    %431 = vmatprep.subr.bf16.mxu0 0
    %432 = vmatpush1.bf16.msra.mxu0 %v251
    %433 = vmatprep.subr.bf16.mxu0 0
    %434 = vmatpush1.bf16.msra.mxu0 %v252
    %435 = vmatprep.subr.bf16.mxu0 0
    %436 = vmatpush1.bf16.msra.mxu0 %v253
    %437 = vmatprep.subr.bf16.mxu0 0
    %438 = vmatpush1.bf16.msra.mxu0 %v254
    %439 = vmatprep.subr.bf16.mxu0 0
    %440 = vmatpush1.bf16.msra.mxu0 %v255
    %441 = vmatprep.subr.bf16.mxu0 0
    %442 = vmatpush1.bf16.msra.mxu0 %v256
    %443 = vmatprep.subr.bf16.mxu0 0
    %444 = vmatpush1.bf16.msra.mxu0 %v257
    %445 = vmatprep.subr.bf16.mxu0 0
    %446 = vmatpush1.bf16.msra.mxu0 %v258
    %447 = vmatprep.subr.bf16.mxu0 0
    %448 = vmatpush1.bf16.msra.mxu0 0
    %449 = vmatprep.subr.bf16.mxu0 0
    %450 = vmatpush1.bf16.msra.mxu0 0
    %451 = vmatprep.subr.bf16.mxu0 0
    %452 = vmatpush1.bf16.msra.mxu0 0
    %453 = vmatprep.subr.bf16.mxu0 0
    %454 = vmatpush1.bf16.msra.mxu0 0
    %455 = vmatprep.subr.bf16.mxu0 0
    %456 = vmatpush1.bf16.msra.mxu0 0
    %457 = vmatprep.subr.bf16.mxu0 0
    %458 = vmatpush1.bf16.msra.mxu0 0
    %459 = vmatprep.subr.bf16.mxu0 0
    %460 = vmatpush1.bf16.msra.mxu0 0
    %461 = vmatprep.subr.bf16.mxu0 0
    %462 = vmatpush1.bf16.msra.mxu0 0
    %463 = vmatprep.mubr.bf16.mxu0 0
    %464 = vmatmul.mubr.bf16.gmra.mrb[0].mxu0 %v430
    %v465 = vpop.f32.mrb[0].mxu0
    %v466 = vadd.f32 %v217, %v465
    %v467 = vpop.f32.mrb[0].mxu0
    %v468 = vpop.f32.mrb[0].mxu0
    %v469 = vpop.f32.mrb[0].mxu0
    %470 = vdwg.mxu0
    %v471 = vpack.c.bf16 %v466, %v466
    %472 = vmatprep.subr.bf16.mxu0 0
    %473 = vmatpush1.bf16.msra.mxu0 %v251
    %474 = vmatprep.subr.bf16.mxu0 0
    %475 = vmatpush1.bf16.msra.mxu0 %v252
    %476 = vmatprep.subr.bf16.mxu0 0
    %477 = vmatpush1.bf16.msra.mxu0 %v253
    %478 = vmatprep.subr.bf16.mxu0 0
    %479 = vmatpush1.bf16.msra.mxu0 %v254
    %480 = vmatprep.subr.bf16.mxu0 0
    %481 = vmatpush1.bf16.msra.mxu0 %v255
    %482 = vmatprep.subr.bf16.mxu0 0
    %483 = vmatpush1.bf16.msra.mxu0 %v256
    %484 = vmatprep.subr.bf16.mxu0 0
    %485 = vmatpush1.bf16.msra.mxu0 %v257
    %486 = vmatprep.subr.bf16.mxu0 0
    %487 = vmatpush1.bf16.msra.mxu0 %v258
    %488 = vmatprep.subr.bf16.mxu0 0
    %489 = vmatpush1.bf16.msra.mxu0 0
    %490 = vmatprep.subr.bf16.mxu0 0
    %491 = vmatpush1.bf16.msra.mxu0 0
    %492 = vmatprep.subr.bf16.mxu0 0
    %493 = vmatpush1.bf16.msra.mxu0 0
    %494 = vmatprep.subr.bf16.mxu0 0
    %495 = vmatpush1.bf16.msra.mxu0 0
    %496 = vmatprep.subr.bf16.mxu0 0
    %497 = vmatpush1.bf16.msra.mxu0 0
    %498 = vmatprep.subr.bf16.mxu0 0
    %499 = vmatpush1.bf16.msra.mxu0 0
    %500 = vmatprep.subr.bf16.mxu0 0
    %501 = vmatpush1.bf16.msra.mxu0 0
    %502 = vmatprep.subr.bf16.mxu0 0
    %503 = vmatpush1.bf16.msra.mxu0 0
    %504 = vmatprep.mubr.bf16.mxu0 0
    %505 = vmatmul.mubr.bf16.gmra.mrb[0].mxu0 %v471
    %v506 = vpop.f32.mrb[0].mxu0
    %v507 = vadd.f32 %v217, %v506
    %v508 = vpop.f32.mrb[0].mxu0
    %v509 = vpop.f32.mrb[0].mxu0
    %v510 = vpop.f32.mrb[0].mxu0
    %511 = vdwg.mxu0
    %v512 = vpack.c.bf16 %v507, %v507
    %513 = vmatprep.subr.bf16.mxu0 0
    %514 = vmatpush1.bf16.msra.mxu0 %v251
    %515 = vmatprep.subr.bf16.mxu0 0
    %516 = vmatpush1.bf16.msra.mxu0 %v252
    %517 = vmatprep.subr.bf16.mxu0 0
    %518 = vmatpush1.bf16.msra.mxu0 %v253
    %519 = vmatprep.subr.bf16.mxu0 0
    %520 = vmatpush1.bf16.msra.mxu0 %v254
    %521 = vmatprep.subr.bf16.mxu0 0
    %522 = vmatpush1.bf16.msra.mxu0 %v255
    %523 = vmatprep.subr.bf16.mxu0 0
    %524 = vmatpush1.bf16.msra.mxu0 %v256
    %525 = vmatprep.subr.bf16.mxu0 0
    %526 = vmatpush1.bf16.msra.mxu0 %v257
    %527 = vmatprep.subr.bf16.mxu0 0
    %528 = vmatpush1.bf16.msra.mxu0 %v258
    %529 = vmatprep.subr.bf16.mxu0 0
    %530 = vmatpush1.bf16.msra.mxu0 0
    %531 = vmatprep.subr.bf16.mxu0 0
    %532 = vmatpush1.bf16.msra.mxu0 0
    %533 = vmatprep.subr.bf16.mxu0 0
    %534 = vmatpush1.bf16.msra.mxu0 0
    %535 = vmatprep.subr.bf16.mxu0 0
    %536 = vmatpush1.bf16.msra.mxu0 0
    %537 = vmatprep.subr.bf16.mxu0 0
    %538 = vmatpush1.bf16.msra.mxu0 0
    %539 = vmatprep.subr.bf16.mxu0 0
    %540 = vmatpush1.bf16.msra.mxu0 0
    %541 = vmatprep.subr.bf16.mxu0 0
    %542 = vmatpush1.bf16.msra.mxu0 0
    %543 = vmatprep.subr.bf16.mxu0 0
    %544 = vmatpush1.bf16.msra.mxu0 0
    %545 = vmatprep.mubr.bf16.mxu0 0
    %546 = vmatmul.mubr.bf16.gmra.mrb[0].mxu0 %v512
    %v547 = vpop.f32.mrb[0].mxu0
    %v548 = vadd.f32 %v217, %v547
    %v549 = vpop.f32.mrb[0].mxu0
    %v550 = vpop.f32.mrb[0].mxu0
    %v551 = vpop.f32.mrb[0].mxu0
    %552 = vdwg.mxu0
    %v553 = vpack.c.bf16 %v548, %v548
    %554 = vmatprep.subr.bf16.mxu0 0
    %555 = vmatpush1.bf16.msra.mxu0 %v251
    %556 = vmatprep.subr.bf16.mxu0 0
    %557 = vmatpush1.bf16.msra.mxu0 %v252
    %558 = vmatprep.subr.bf16.mxu0 0
    %559 = vmatpush1.bf16.msra.mxu0 %v253
    %560 = vmatprep.subr.bf16.mxu0 0
    %561 = vmatpush1.bf16.msra.mxu0 %v254
    %562 = vmatprep.subr.bf16.mxu0 0
    %563 = vmatpush1.bf16.msra.mxu0 %v255
    %564 = vmatprep.subr.bf16.mxu0 0
    %565 = vmatpush1.bf16.msra.mxu0 %v256
    %566 = vmatprep.subr.bf16.mxu0 0
    %567 = vmatpush1.bf16.msra.mxu0 %v257
    %568 = vmatprep.subr.bf16.mxu0 0
    %569 = vmatpush1.bf16.msra.mxu0 %v258
    %570 = vmatprep.subr.bf16.mxu0 0
    %571 = vmatpush1.bf16.msra.mxu0 0
    %572 = vmatprep.subr.bf16.mxu0 0
    %573 = vmatpush1.bf16.msra.mxu0 0
    %574 = vmatprep.subr.bf16.mxu0 0
    %575 = vmatpush1.bf16.msra.mxu0 0
    %576 = vmatprep.subr.bf16.mxu0 0
    %577 = vmatpush1.bf16.msra.mxu0 0
    %578 = vmatprep.subr.bf16.mxu0 0
    %579 = vmatpush1.bf16.msra.mxu0 0
    %580 = vmatprep.subr.bf16.mxu0 0
    %581 = vmatpush1.bf16.msra.mxu0 0
    %582 = vmatprep.subr.bf16.mxu0 0
    %583 = vmatpush1.bf16.msra.mxu0 0
    %584 = vmatprep.subr.bf16.mxu0 0
    %585 = vmatpush1.bf16.msra.mxu0 0
    %586 = vmatprep.mubr.bf16.mxu0 0
    %587 = vmatmul.mubr.bf16.gmra.mrb[0].mxu0 %v553
    %v588 = vpop.f32.mrb[0].mxu0
    %v589 = vadd.f32 %v217, %v588
    %v590 = vpop.f32.mrb[0].mxu0
    %v591 = vpop.f32.mrb[0].mxu0
    %v592 = vpop.f32.mrb[0].mxu0
    %593 = vdwg.mxu0
    %v594 = vpack.c.bf16 %v589, %v589
    %595 = vmatprep.subr.bf16.mxu0 0
    %596 = vmatpush1.bf16.msra.mxu0 %v251
    %597 = vmatprep.subr.bf16.mxu0 0
    %598 = vmatpush1.bf16.msra.mxu0 %v252
    %599 = vmatprep.subr.bf16.mxu0 0
    %600 = vmatpush1.bf16.msra.mxu0 %v253
    %601 = vmatprep.subr.bf16.mxu0 0
    %602 = vmatpush1.bf16.msra.mxu0 %v254
    %603 = vmatprep.subr.bf16.mxu0 0
    %604 = vmatpush1.bf16.msra.mxu0 %v255
    %605 = vmatprep.subr.bf16.mxu0 0
    %606 = vmatpush1.bf16.msra.mxu0 %v256
    %607 = vmatprep.subr.bf16.mxu0 0
    %608 = vmatpush1.bf16.msra.mxu0 %v257
    %609 = vmatprep.subr.bf16.mxu0 0
    %610 = vmatpush1.bf16.msra.mxu0 %v258
    %611 = vmatprep.subr.bf16.mxu0 0
    %612 = vmatpush1.bf16.msra.mxu0 0
    %613 = vmatprep.subr.bf16.mxu0 0
    %614 = vmatpush1.bf16.msra.mxu0 0
    %615 = vmatprep.subr.bf16.mxu0 0
    %616 = vmatpush1.bf16.msra.mxu0 0
    %617 = vmatprep.subr.bf16.mxu0 0
    %618 = vmatpush1.bf16.msra.mxu0 0
    %619 = vmatprep.subr.bf16.mxu0 0
    %620 = vmatpush1.bf16.msra.mxu0 0
    %621 = vmatprep.subr.bf16.mxu0 0
    %622 = vmatpush1.bf16.msra.mxu0 0
    %623 = vmatprep.subr.bf16.mxu0 0
    %624 = vmatpush1.bf16.msra.mxu0 0
    %625 = vmatprep.subr.bf16.mxu0 0
    %626 = vmatpush1.bf16.msra.mxu0 0
    %627 = vmatprep.mubr.bf16.mxu0 0
    %628 = vmatmul.mubr.bf16.gmra.mrb[0].mxu0 %v594
    %v629 = vpop.f32.mrb[0].mxu0
    %v630 = vadd.f32 %v217, %v629
    %v631 = vpop.f32.mrb[0].mxu0
    %v632 = vpop.f32.mrb[0].mxu0
    %v633 = vpop.f32.mrb[0].mxu0
    %634 = vdwg.mxu0
    %v635 = vpack.c.bf16 %v630, %v630
    %636 = vmatprep.subr.bf16.mxu0 0
    %637 = vmatpush1.bf16.msra.mxu0 %v251
    %638 = vmatprep.subr.bf16.mxu0 0
    %639 = vmatpush1.bf16.msra.mxu0 %v252
    %640 = vmatprep.subr.bf16.mxu0 0
    %641 = vmatpush1.bf16.msra.mxu0 %v253
    %642 = vmatprep.subr.bf16.mxu0 0
    %643 = vmatpush1.bf16.msra.mxu0 %v254
    %644 = vmatprep.subr.bf16.mxu0 0
    %645 = vmatpush1.bf16.msra.mxu0 %v255
    %646 = vmatprep.subr.bf16.mxu0 0
    %647 = vmatpush1.bf16.msra.mxu0 %v256
    %648 = vmatprep.subr.bf16.mxu0 0
    %649 = vmatpush1.bf16.msra.mxu0 %v257
    %650 = vmatprep.subr.bf16.mxu0 0
    %651 = vmatpush1.bf16.msra.mxu0 %v258
    %652 = vmatprep.subr.bf16.mxu0 0
    %653 = vmatpush1.bf16.msra.mxu0 0
    %654 = vmatprep.subr.bf16.mxu0 0
    %655 = vmatpush1.bf16.msra.mxu0 0
    %656 = vmatprep.subr.bf16.mxu0 0
    %657 = vmatpush1.bf16.msra.mxu0 0
    %658 = vmatprep.subr.bf16.mxu0 0
    %659 = vmatpush1.bf16.msra.mxu0 0
    %660 = vmatprep.subr.bf16.mxu0 0
    %661 = vmatpush1.bf16.msra.mxu0 0
    %662 = vmatprep.subr.bf16.mxu0 0
    %663 = vmatpush1.bf16.msra.mxu0 0
    %664 = vmatprep.subr.bf16.mxu0 0
    %665 = vmatpush1.bf16.msra.mxu0 0
    %666 = vmatprep.subr.bf16.mxu0 0
    %667 = vmatpush1.bf16.msra.mxu0 0
    %668 = vmatprep.mubr.bf16.mxu0 0
    %669 = vmatmul.mubr.bf16.gmra.mrb[0].mxu0 %v635
    %v670 = vpop.f32.mrb[0].mxu0
    %v671 = vadd.f32 %v217, %v670
    %v672 = vpop.f32.mrb[0].mxu0
    %v673 = vpop.f32.mrb[0].mxu0
    %v674 = vpop.f32.mrb[0].mxu0
    %675 = vdwg.mxu0
    %v676 = vpack.c.bf16 %v671, %v671
    %677 = vmatprep.subr.bf16.mxu0 0
    %678 = vmatpush1.bf16.msra.mxu0 %v251
    %679 = vmatprep.subr.bf16.mxu0 0
    %680 = vmatpush1.bf16.msra.mxu0 %v252
    %681 = vmatprep.subr.bf16.mxu0 0
    %682 = vmatpush1.bf16.msra.mxu0 %v253
    %683 = vmatprep.subr.bf16.mxu0 0
    %684 = vmatpush1.bf16.msra.mxu0 %v254
    %685 = vmatprep.subr.bf16.mxu0 0
    %686 = vmatpush1.bf16.msra.mxu0 %v255
    %687 = vmatprep.subr.bf16.mxu0 0
    %688 = vmatpush1.bf16.msra.mxu0 %v256
    %689 = vmatprep.subr.bf16.mxu0 0
    %690 = vmatpush1.bf16.msra.mxu0 %v257
    %691 = vmatprep.subr.bf16.mxu0 0
    %692 = vmatpush1.bf16.msra.mxu0 %v258
    %693 = vmatprep.subr.bf16.mxu0 0
    %694 = vmatpush1.bf16.msra.mxu0 0
    %695 = vmatprep.subr.bf16.mxu0 0
    %696 = vmatpush1.bf16.msra.mxu0 0
    %697 = vmatprep.subr.bf16.mxu0 0
    %698 = vmatpush1.bf16.msra.mxu0 0
    %699 = vmatprep.subr.bf16.mxu0 0
    %700 = vmatpush1.bf16.msra.mxu0 0
    %701 = vmatprep.subr.bf16.mxu0 0
    %702 = vmatpush1.bf16.msra.mxu0 0
    %703 = vmatprep.subr.bf16.mxu0 0
    %704 = vmatpush1.bf16.msra.mxu0 0
    %705 = vmatprep.subr.bf16.mxu0 0
    %706 = vmatpush1.bf16.msra.mxu0 0
    %707 = vmatprep.subr.bf16.mxu0 0
    %708 = vmatpush1.bf16.msra.mxu0 0
    %709 = vmatprep.mubr.bf16.mxu0 0
    %710 = vmatmul.mubr.bf16.gmra.mrb[0].mxu0 %v676
    %v711 = vpop.f32.mrb[0].mxu0
    %v712 = vadd.f32 %v217, %v711
    %v713 = vpop.f32.mrb[0].mxu0
    %v714 = vpop.f32.mrb[0].mxu0
    %v715 = vpop.f32.mrb[0].mxu0
    %716 = vdwg.mxu0
    %v717 = vpack.c.bf16 %v712, %v712
    %718 = vmatprep.subr.bf16.mxu0 0
    %719 = vmatpush1.bf16.msra.mxu0 %v251
    %720 = vmatprep.subr.bf16.mxu0 0
    %721 = vmatpush1.bf16.msra.mxu0 %v252
    %722 = vmatprep.subr.bf16.mxu0 0
    %723 = vmatpush1.bf16.msra.mxu0 %v253
    %724 = vmatprep.subr.bf16.mxu0 0
    %725 = vmatpush1.bf16.msra.mxu0 %v254
    %726 = vmatprep.subr.bf16.mxu0 0
    %727 = vmatpush1.bf16.msra.mxu0 %v255
    %728 = vmatprep.subr.bf16.mxu0 0
    %729 = vmatpush1.bf16.msra.mxu0 %v256
    %730 = vmatprep.subr.bf16.mxu0 0
    %731 = vmatpush1.bf16.msra.mxu0 %v257
    %732 = vmatprep.subr.bf16.mxu0 0
    %733 = vmatpush1.bf16.msra.mxu0 %v258
    %734 = vmatprep.subr.bf16.mxu0 0
    %735 = vmatpush1.bf16.msra.mxu0 0
    %736 = vmatprep.subr.bf16.mxu0 0
    %737 = vmatpush1.bf16.msra.mxu0 0
    %738 = vmatprep.subr.bf16.mxu0 0
    %739 = vmatpush1.bf16.msra.mxu0 0
    %740 = vmatprep.subr.bf16.mxu0 0
    %741 = vmatpush1.bf16.msra.mxu0 0
    %742 = vmatprep.subr.bf16.mxu0 0
    %743 = vmatpush1.bf16.msra.mxu0 0
    %744 = vmatprep.subr.bf16.mxu0 0
    %745 = vmatpush1.bf16.msra.mxu0 0
    %746 = vmatprep.subr.bf16.mxu0 0
    %747 = vmatpush1.bf16.msra.mxu0 0
    %748 = vmatprep.subr.bf16.mxu0 0
    %749 = vmatpush1.bf16.msra.mxu0 0
    %750 = vmatprep.mubr.bf16.mxu0 0
    %751 = vmatmul.mubr.bf16.gmra.mrb[0].mxu0 %v717
    %v752 = vpop.f32.mrb[0].mxu0
    %v753 = vadd.f32 %v217, %v752
    %v754 = vpop.f32.mrb[0].mxu0
    %v755 = vpop.f32.mrb[0].mxu0
    %v756 = vpop.f32.mrb[0].mxu0
    %757 = vdwg.mxu0
    %v758 = vpack.c.bf16 %v753, %v753
    %759 = vmatprep.subr.bf16.mxu0 0
    %760 = vmatpush1.bf16.msra.mxu0 %v251
    %761 = vmatprep.subr.bf16.mxu0 0
    %762 = vmatpush1.bf16.msra.mxu0 %v252
    %763 = vmatprep.subr.bf16.mxu0 0
    %764 = vmatpush1.bf16.msra.mxu0 %v253
    %765 = vmatprep.subr.bf16.mxu0 0
    %766 = vmatpush1.bf16.msra.mxu0 %v254
    %767 = vmatprep.subr.bf16.mxu0 0
    %768 = vmatpush1.bf16.msra.mxu0 %v255
    %769 = vmatprep.subr.bf16.mxu0 0
    %770 = vmatpush1.bf16.msra.mxu0 %v256
    %771 = vmatprep.subr.bf16.mxu0 0
    %772 = vmatpush1.bf16.msra.mxu0 %v257
    %773 = vmatprep.subr.bf16.mxu0 0
    %774 = vmatpush1.bf16.msra.mxu0 %v258
    %775 = vmatprep.subr.bf16.mxu0 0
    %776 = vmatpush1.bf16.msra.mxu0 0
    %777 = vmatprep.subr.bf16.mxu0 0
    %778 = vmatpush1.bf16.msra.mxu0 0
    %779 = vmatprep.subr.bf16.mxu0 0
    %780 = vmatpush1.bf16.msra.mxu0 0
    %781 = vmatprep.subr.bf16.mxu0 0
    %782 = vmatpush1.bf16.msra.mxu0 0
    %783 = vmatprep.subr.bf16.mxu0 0
    %784 = vmatpush1.bf16.msra.mxu0 0
    %785 = vmatprep.subr.bf16.mxu0 0
    %786 = vmatpush1.bf16.msra.mxu0 0
    %787 = vmatprep.subr.bf16.mxu0 0
    %788 = vmatpush1.bf16.msra.mxu0 0
    %789 = vmatprep.subr.bf16.mxu0 0
    %790 = vmatpush1.bf16.msra.mxu0 0
    %791 = vmatprep.mubr.bf16.mxu0 0
    %792 = vmatmul.mubr.bf16.gmra.mrb[0].mxu0 %v758
    %v793 = vpop.f32.mrb[0].mxu0
    %v794 = vadd.f32 %v217, %v793
    %v795 = vpop.f32.mrb[0].mxu0
    %v796 = vpop.f32.mrb[0].mxu0
    %v797 = vpop.f32.mrb[0].mxu0
    %798 = vdwg.mxu0
    %v799 = vpack.c.bf16 %v794, %v794
    %800 = vmatprep.subr.bf16.mxu0 0
    %801 = vmatpush1.bf16.msra.mxu0 %v251
    %802 = vmatprep.subr.bf16.mxu0 0
    %803 = vmatpush1.bf16.msra.mxu0 %v252
    %804 = vmatprep.subr.bf16.mxu0 0
    %805 = vmatpush1.bf16.msra.mxu0 %v253
    %806 = vmatprep.subr.bf16.mxu0 0
    %807 = vmatpush1.bf16.msra.mxu0 %v254
    %808 = vmatprep.subr.bf16.mxu0 0
    %809 = vmatpush1.bf16.msra.mxu0 %v255
    %810 = vmatprep.subr.bf16.mxu0 0
    %811 = vmatpush1.bf16.msra.mxu0 %v256
    %812 = vmatprep.subr.bf16.mxu0 0
    %813 = vmatpush1.bf16.msra.mxu0 %v257
    %814 = vmatprep.subr.bf16.mxu0 0
    %815 = vmatpush1.bf16.msra.mxu0 %v258
    %816 = vmatprep.subr.bf16.mxu0 0
    %817 = vmatpush1.bf16.msra.mxu0 0
    %818 = vmatprep.subr.bf16.mxu0 0
    %819 = vmatpush1.bf16.msra.mxu0 0
    %820 = vmatprep.subr.bf16.mxu0 0
    %821 = vmatpush1.bf16.msra.mxu0 0
    %822 = vmatprep.subr.bf16.mxu0 0
    %823 = vmatpush1.bf16.msra.mxu0 0
    %824 = vmatprep.subr.bf16.mxu0 0
    %825 = vmatpush1.bf16.msra.mxu0 0
    %826 = vmatprep.subr.bf16.mxu0 0
    %827 = vmatpush1.bf16.msra.mxu0 0
    %828 = vmatprep.subr.bf16.mxu0 0
    %829 = vmatpush1.bf16.msra.mxu0 0
    %830 = vmatprep.subr.bf16.mxu0 0
    %831 = vmatpush1.bf16.msra.mxu0 0
    %832 = vmatprep.mubr.bf16.mxu0 0
    %833 = vmatmul.mubr.bf16.gmra.mrb[0].mxu0 %v799
    %v834 = vpop.f32.mrb[0].mxu0
    %v835 = vadd.f32 %v217, %v834
    %v836 = vpop.f32.mrb[0].mxu0
    %v837 = vpop.f32.mrb[0].mxu0
    %v838 = vpop.f32.mrb[0].mxu0
    %839 = vdwg.mxu0
    %v840 = vpack.c.bf16 %v835, %v835
    %841 = vmatprep.subr.bf16.mxu0 0
    %842 = vmatpush1.bf16.msra.mxu0 %v251
    %843 = vmatprep.subr.bf16.mxu0 0
    %844 = vmatpush1.bf16.msra.mxu0 %v252
    %845 = vmatprep.subr.bf16.mxu0 0
    %846 = vmatpush1.bf16.msra.mxu0 %v253
    %847 = vmatprep.subr.bf16.mxu0 0
    %848 = vmatpush1.bf16.msra.mxu0 %v254
    %849 = vmatprep.subr.bf16.mxu0 0
    %850 = vmatpush1.bf16.msra.mxu0 %v255
    %851 = vmatprep.subr.bf16.mxu0 0
    %852 = vmatpush1.bf16.msra.mxu0 %v256
    %853 = vmatprep.subr.bf16.mxu0 0
    %854 = vmatpush1.bf16.msra.mxu0 %v257
    %855 = vmatprep.subr.bf16.mxu0 0
    %856 = vmatpush1.bf16.msra.mxu0 %v258
    %857 = vmatprep.subr.bf16.mxu0 0
    %858 = vmatpush1.bf16.msra.mxu0 0
    %859 = vmatprep.subr.bf16.mxu0 0
    %860 = vmatpush1.bf16.msra.mxu0 0
    %861 = vmatprep.subr.bf16.mxu0 0
    %862 = vmatpush1.bf16.msra.mxu0 0
    %863 = vmatprep.subr.bf16.mxu0 0
    %864 = vmatpush1.bf16.msra.mxu0 0
    %865 = vmatprep.subr.bf16.mxu0 0
    %866 = vmatpush1.bf16.msra.mxu0 0
    %867 = vmatprep.subr.bf16.mxu0 0
    %868 = vmatpush1.bf16.msra.mxu0 0
    %869 = vmatprep.subr.bf16.mxu0 0
    %870 = vmatpush1.bf16.msra.mxu0 0
    %871 = vmatprep.subr.bf16.mxu0 0
    %872 = vmatpush1.bf16.msra.mxu0 0
    %873 = vmatprep.mubr.bf16.mxu0 0
    %874 = vmatmul.mubr.bf16.gmra.mrb[0].mxu0 %v840
    %v875 = vpop.f32.mrb[0].mxu0
    %v876 = vadd.f32 %v217, %v875
    %v877 = vpop.f32.mrb[0].mxu0
    %v878 = vpop.f32.mrb[0].mxu0
    %v879 = vpop.f32.mrb[0].mxu0
    %880 = vdwg.mxu0
    %v881 = vpack.c.bf16 %v876, %v876
    %882 = vmatprep.subr.bf16.mxu0 0
    %883 = vmatpush1.bf16.msra.mxu0 %v251
    %884 = vmatprep.subr.bf16.mxu0 0
    %885 = vmatpush1.bf16.msra.mxu0 %v252
    %886 = vmatprep.subr.bf16.mxu0 0
    %887 = vmatpush1.bf16.msra.mxu0 %v253
    %888 = vmatprep.subr.bf16.mxu0 0
    %889 = vmatpush1.bf16.msra.mxu0 %v254
    %890 = vmatprep.subr.bf16.mxu0 0
    %891 = vmatpush1.bf16.msra.mxu0 %v255
    %892 = vmatprep.subr.bf16.mxu0 0
    %893 = vmatpush1.bf16.msra.mxu0 %v256
    %894 = vmatprep.subr.bf16.mxu0 0
    %895 = vmatpush1.bf16.msra.mxu0 %v257
    %896 = vmatprep.subr.bf16.mxu0 0
    %897 = vmatpush1.bf16.msra.mxu0 %v258
    %898 = vmatprep.subr.bf16.mxu0 0
    %899 = vmatpush1.bf16.msra.mxu0 0
    %900 = vmatprep.subr.bf16.mxu0 0
    %901 = vmatpush1.bf16.msra.mxu0 0
    %902 = vmatprep.subr.bf16.mxu0 0
    %903 = vmatpush1.bf16.msra.mxu0 0
    %904 = vmatprep.subr.bf16.mxu0 0
    %905 = vmatpush1.bf16.msra.mxu0 0
    %906 = vmatprep.subr.bf16.mxu0 0
    %907 = vmatpush1.bf16.msra.mxu0 0
    %908 = vmatprep.subr.bf16.mxu0 0
    %909 = vmatpush1.bf16.msra.mxu0 0
    %910 = vmatprep.subr.bf16.mxu0 0
    %911 = vmatpush1.bf16.msra.mxu0 0
    %912 = vmatprep.subr.bf16.mxu0 0
    %913 = vmatpush1.bf16.msra.mxu0 0
    %914 = vmatprep.mubr.bf16.mxu0 0
    %915 = vmatmul.mubr.bf16.gmra.mrb[0].mxu0 %v881
    %v916 = vpop.f32.mrb[0].mxu0
    %v917 = vadd.f32 %v217, %v916
    %v918 = vpop.f32.mrb[0].mxu0
    %v919 = vpop.f32.mrb[0].mxu0
    %v920 = vpop.f32.mrb[0].mxu0
    %921 = vdwg.mxu0
    %v922 = vpack.c.bf16 %v917, %v917
    %923 = vmatprep.subr.bf16.mxu0 0
    %924 = vmatpush1.bf16.msra.mxu0 %v251
    %925 = vmatprep.subr.bf16.mxu0 0
    %926 = vmatpush1.bf16.msra.mxu0 %v252
    %927 = vmatprep.subr.bf16.mxu0 0
    %928 = vmatpush1.bf16.msra.mxu0 %v253
    %929 = vmatprep.subr.bf16.mxu0 0
    %930 = vmatpush1.bf16.msra.mxu0 %v254
    %931 = vmatprep.subr.bf16.mxu0 0
    %932 = vmatpush1.bf16.msra.mxu0 %v255
    %933 = vmatprep.subr.bf16.mxu0 0
    %934 = vmatpush1.bf16.msra.mxu0 %v256
    %935 = vmatprep.subr.bf16.mxu0 0
    %936 = vmatpush1.bf16.msra.mxu0 %v257
    %937 = vmatprep.subr.bf16.mxu0 0
    %938 = vmatpush1.bf16.msra.mxu0 %v258
    %939 = vmatprep.subr.bf16.mxu0 0
    %940 = vmatpush1.bf16.msra.mxu0 0
    %941 = vmatprep.subr.bf16.mxu0 0
    %942 = vmatpush1.bf16.msra.mxu0 0
    %943 = vmatprep.subr.bf16.mxu0 0
    %944 = vmatpush1.bf16.msra.mxu0 0
    %945 = vmatprep.subr.bf16.mxu0 0
    %946 = vmatpush1.bf16.msra.mxu0 0
    %947 = vmatprep.subr.bf16.mxu0 0
    %948 = vmatpush1.bf16.msra.mxu0 0
    %949 = vmatprep.subr.bf16.mxu0 0
    %950 = vmatpush1.bf16.msra.mxu0 0
    %951 = vmatprep.subr.bf16.mxu0 0
    %952 = vmatpush1.bf16.msra.mxu0 0
    %953 = vmatprep.subr.bf16.mxu0 0
    %954 = vmatpush1.bf16.msra.mxu0 0
    %955 = vmatprep.mubr.bf16.mxu0 0
    %956 = vmatmul.mubr.bf16.gmra.mrb[0].mxu0 %v922
    %v957 = vpop.f32.mrb[0].mxu0
    %v958 = vadd.f32 %v217, %v957
    %v959 = vpop.f32.mrb[0].mxu0
    %v960 = vpop.f32.mrb[0].mxu0
    %v961 = vpop.f32.mrb[0].mxu0
    %962 = vdwg.mxu0
    %v963 = vpack.c.bf16 %v958, %v958
    %964 = vmatprep.subr.bf16.mxu0 0
    %965 = vmatpush1.bf16.msra.mxu0 %v251
    %966 = vmatprep.subr.bf16.mxu0 0
    %967 = vmatpush1.bf16.msra.mxu0 %v252
    %968 = vmatprep.subr.bf16.mxu0 0
    %969 = vmatpush1.bf16.msra.mxu0 %v253
    %970 = vmatprep.subr.bf16.mxu0 0
    %971 = vmatpush1.bf16.msra.mxu0 %v254
    %972 = vmatprep.subr.bf16.mxu0 0
    %973 = vmatpush1.bf16.msra.mxu0 %v255
    %974 = vmatprep.subr.bf16.mxu0 0
    %975 = vmatpush1.bf16.msra.mxu0 %v256
    %976 = vmatprep.subr.bf16.mxu0 0
    %977 = vmatpush1.bf16.msra.mxu0 %v257
    %978 = vmatprep.subr.bf16.mxu0 0
    %979 = vmatpush1.bf16.msra.mxu0 %v258
    %980 = vmatprep.subr.bf16.mxu0 0
    %981 = vmatpush1.bf16.msra.mxu0 0
    %982 = vmatprep.subr.bf16.mxu0 0
    %983 = vmatpush1.bf16.msra.mxu0 0
    %984 = vmatprep.subr.bf16.mxu0 0
    %985 = vmatpush1.bf16.msra.mxu0 0
    %986 = vmatprep.subr.bf16.mxu0 0
    %987 = vmatpush1.bf16.msra.mxu0 0
    %988 = vmatprep.subr.bf16.mxu0 0
    %989 = vmatpush1.bf16.msra.mxu0 0
    %990 = vmatprep.subr.bf16.mxu0 0
    %991 = vmatpush1.bf16.msra.mxu0 0
    %992 = vmatprep.subr.bf16.mxu0 0
    %993 = vmatpush1.bf16.msra.mxu0 0
    %994 = vmatprep.subr.bf16.mxu0 0
    %995 = vmatpush1.bf16.msra.mxu0 0
    %996 = vmatprep.mubr.bf16.mxu0 0
    %997 = vmatmul.mubr.bf16.gmra.mrb[0].mxu0 %v963
    %v998 = vpop.f32.mrb[0].mxu0
    %v999 = vadd.f32 %v217, %v998
    %v1000 = vpop.f32.mrb[0].mxu0
    %v1001 = vpop.f32.mrb[0].mxu0
    %v1002 = vpop.f32.mrb[0].mxu0
    %1003 = vdwg.mxu0
    %v1004 = vpack.c.bf16 %v999, %v999
    %1005 = vmatprep.subr.bf16.mxu0 0
    %1006 = vmatpush1.bf16.msra.mxu0 %v251
    %1007 = vmatprep.subr.bf16.mxu0 0
    %1008 = vmatpush1.bf16.msra.mxu0 %v252
    %1009 = vmatprep.subr.bf16.mxu0 0
    %1010 = vmatpush1.bf16.msra.mxu0 %v253
    %1011 = vmatprep.subr.bf16.mxu0 0
    %1012 = vmatpush1.bf16.msra.mxu0 %v254
    %1013 = vmatprep.subr.bf16.mxu0 0
    %1014 = vmatpush1.bf16.msra.mxu0 %v255
    %1015 = vmatprep.subr.bf16.mxu0 0
    %1016 = vmatpush1.bf16.msra.mxu0 %v256
    %1017 = vmatprep.subr.bf16.mxu0 0
    %1018 = vmatpush1.bf16.msra.mxu0 %v257
    %1019 = vmatprep.subr.bf16.mxu0 0
    %1020 = vmatpush1.bf16.msra.mxu0 %v258
    %1021 = vmatprep.subr.bf16.mxu0 0
    %1022 = vmatpush1.bf16.msra.mxu0 0
    %1023 = vmatprep.subr.bf16.mxu0 0
    %1024 = vmatpush1.bf16.msra.mxu0 0
    %1025 = vmatprep.subr.bf16.mxu0 0
    %1026 = vmatpush1.bf16.msra.mxu0 0
    %1027 = vmatprep.subr.bf16.mxu0 0
    %1028 = vmatpush1.bf16.msra.mxu0 0
    %1029 = vmatprep.subr.bf16.mxu0 0
    %1030 = vmatpush1.bf16.msra.mxu0 0
    %1031 = vmatprep.subr.bf16.mxu0 0
    %1032 = vmatpush1.bf16.msra.mxu0 0
    %1033 = vmatprep.subr.bf16.mxu0 0
    %1034 = vmatpush1.bf16.msra.mxu0 0
    %1035 = vmatprep.subr.bf16.mxu0 0
    %1036 = vmatpush1.bf16.msra.mxu0 0
    %1037 = vmatprep.mubr.bf16.mxu0 0
    %1038 = vmatmul.mubr.bf16.gmra.mrb[0].mxu0 %v1004
    %v1039 = vpop.f32.mrb[0].mxu0
    %v1040 = vadd.f32 %v217, %v1039
    %v1041 = vpop.f32.mrb[0].mxu0
    %v1042 = vpop.f32.mrb[0].mxu0
    %v1043 = vpop.f32.mrb[0].mxu0
    %1044 = vdwg.mxu0
    %v1045 = vpack.c.bf16 %v1040, %v1040
    %1046 = vmatprep.subr.bf16.mxu0 0
    %1047 = vmatpush1.bf16.msra.mxu0 %v251
    %1048 = vmatprep.subr.bf16.mxu0 0
    %1049 = vmatpush1.bf16.msra.mxu0 %v252
    %1050 = vmatprep.subr.bf16.mxu0 0
    %1051 = vmatpush1.bf16.msra.mxu0 %v253
    %1052 = vmatprep.subr.bf16.mxu0 0
    %1053 = vmatpush1.bf16.msra.mxu0 %v254
    %1054 = vmatprep.subr.bf16.mxu0 0
    %1055 = vmatpush1.bf16.msra.mxu0 %v255
    %1056 = vmatprep.subr.bf16.mxu0 0
    %1057 = vmatpush1.bf16.msra.mxu0 %v256
    %1058 = vmatprep.subr.bf16.mxu0 0
    %1059 = vmatpush1.bf16.msra.mxu0 %v257
    %1060 = vmatprep.subr.bf16.mxu0 0
    %1061 = vmatpush1.bf16.msra.mxu0 %v258
    %1062 = vmatprep.subr.bf16.mxu0 0
    %1063 = vmatpush1.bf16.msra.mxu0 0
    %1064 = vmatprep.subr.bf16.mxu0 0
    %1065 = vmatpush1.bf16.msra.mxu0 0
    %1066 = vmatprep.subr.bf16.mxu0 0
    %1067 = vmatpush1.bf16.msra.mxu0 0
    %1068 = vmatprep.subr.bf16.mxu0 0
    %1069 = vmatpush1.bf16.msra.mxu0 0
    %1070 = vmatprep.subr.bf16.mxu0 0
    %1071 = vmatpush1.bf16.msra.mxu0 0
    %1072 = vmatprep.subr.bf16.mxu0 0
    %1073 = vmatpush1.bf16.msra.mxu0 0
    %1074 = vmatprep.subr.bf16.mxu0 0
    %1075 = vmatpush1.bf16.msra.mxu0 0
    %1076 = vmatprep.subr.bf16.mxu0 0
    %1077 = vmatpush1.bf16.msra.mxu0 0
    %1078 = vmatprep.mubr.bf16.mxu0 0
    %1079 = vmatmul.mubr.bf16.gmra.mrb[0].mxu0 %v1045
    %v1080 = vpop.f32.mrb[0].mxu0
    %v1081 = vadd.f32 %v217, %v1080
    %v1082 = vpop.f32.mrb[0].mxu0
    %v1083 = vpop.f32.mrb[0].mxu0
    %v1084 = vpop.f32.mrb[0].mxu0
    %1085 = vdwg.mxu0
    %v1086 = vmul.f32 %v1081, %v1081
    %1087 = vadd.xlane.f32.xlu0 %v1086
    %v1088 = vpop.xlane.xlu0 %1087
    %v1089 = vmul.f32 %v1088, 0.03125
    %v1090 = vrsqrt.pop %v1089
    %v1091 = vmul.f32 %v1089, %v1090
    %vm1092 = vcmp.eq.f32.partialorder %v1089, inf
    %v1093 = vsel %vm1092, %v1089, %v1091
    %vm1094 = vcmp.eq.f32.partialorder %v1089, 0.0
    %v1095 = vand.u32 %v1089, 2147483648
    %v1096 = vsel %vm1094, %v1095, %v1093
    %v1097 = vadd.f32 %v1096, 1e-08
    %v1098 = vrcp.pop %v1097
    %v1099 = vmul.f32 1.0, %v1098
    %v1100 = vmul.f32 %v1081, %v1099
    %v1101 = vpack.c.bf16 %v1100, %v1100
    %1102 = vst [vmem:[#allocation8] sm:$0xf] %v1101
    // Predicated region
    $region34: #{tpu_custom_call.1} parent=1 // pred_check
      _
    $region35: #{tpu_custom_call.1} parent=1 // pred_check_branch
      %1104 = sbr.rel (0) target = $region37
    $region36: #{tpu_custom_call.1} parent=1 // pred_region
      %s1106 = ssub.s32 64, 64
      %1107 = vsyncadd [#allocation4], %s1106
      %s1109 = sshll.u32 [#allocation8], 4
      %s1110 = int_to_ptr.vmem [resolvable:$true] %s1109
      %1112 = dma.vmem_to_hbm [thread:$0]  %s1110, 64, %s5, [#allocation4]
    $region37: #{tpu_custom_call.1} parent=1 // pred_fallthru
      _
    // Predicated region
    $region38: #{tpu_custom_call.1} parent=1 // pred_check
      _
    $region39: #{tpu_custom_call.1} parent=1 // pred_check_branch
      %1114 = sbr.rel (0) target = $region41
    $region40: #{tpu_custom_call.1} parent=1 // pred_region
      %1115 = dma.done [#allocation4], 64
    $region41: #{tpu_custom_call.1} parent=1 // pred_fallthru
      _
    %1116 = vsyncpa [#allocation3], 1
    %1117 = vsyncpa [#allocation6], 1
    %1118 = vsyncpa [#allocation4], 1

</llo_original>
